<compile_context>
chip_gen: v6e
topology: v6e:2x2x1
jax: 0.10.0
libtpu: 0.0.40
codegen_flags: <defaults>
</compile_context>

<pallas_src>
import functools

import jax
import jax.numpy as jnp
from jax.experimental import pallas as pl
from jax.experimental.pallas import tpu as pltpu


MM_DTYPE = jnp.bfloat16   # MXU operand dtype; accumulation stays f32


def _layernorm(x, gamma, beta, eps=1e-5):
    mu = jnp.mean(x, axis=-1, keepdims=True)
    var = jnp.mean(jnp.square(x - mu), axis=-1, keepdims=True)
    return (x - mu) * jax.lax.rsqrt(var + eps) * gamma + beta


def encoder_layers_kernel(x_ref, wo_ref, g1_ref, be1_ref,
                          w1_ref, bb1_ref, w2_ref, bb2_ref,
                          g2_ref, be2_ref, o_ref, att_ref, *,
                          heads, embed_size, b_tile, seq, seq_valid):
    """All Transformer_block layers for one batch tile.

    Grid = (batch_tiles, num_layers).  The output block index is constant over
    the layer axis, so o_ref stays resident in VMEM and acts as the carried
    activation between layers.

    x_ref:   (b_tile, S, E) f32 embeddings (only consumed at layer 0)
    wo_ref:  (1, E, E) bf16 fc_out weight (in x out)
    g*/be*:  (1, 1, E) f32 layernorm gamma / beta
    w1_ref:  (1, E, F) bf16, bb1_ref: (1, 1, F) f32   feed-forward layer 1
    w2_ref:  (1, F, E) bf16, bb2_ref: (1, 1, E) f32   feed-forward layer 2
    o_ref:   (b_tile, S, E) f32 resident activation / final output
    att_ref: (b_tile, S, E) f32 VMEM scratch for the per-head outputs
    """
    E = embed_size
    D = E // heads
    S = seq
    rows = b_tile * S
    # energy / embed_size**(-1/2) == energy * sqrt(embed_size)  (reproduced bug)
    scale = float(E) ** 0.5

    @pl.when(pl.program_id(1) == 0)
    def _():
        o_ref[...] = x_ref[...]

    x3 = o_ref[...]                       # (b_tile, S, E) f32 resident activation
    x2 = x3.reshape(rows, E)              # free view (S is a multiple of 8)

    # Hoisted bf16 casts: one scaled copy for Q (scale folded in f32), one for K/V.
    qb = (x3 * scale).astype(MM_DTYPE)    # (b_tile, S, E)
    kb = x3.astype(MM_DTYPE)              # (b_tile, S, E)

    wo = wo_ref[0]                        # (E, E) bf16
    w1 = w1_ref[0]                        # (E, F) bf16
    w2 = w2_ref[0]                        # (F, E) bf16

    # --- self-attention: batched over b_tile, small static unroll over heads ---
    for h in range(heads):
        sl = slice(h * D, (h + 1) * D)
        # bf16 x bf16 -> f32 acc, contracting D, no explicit K transpose.
        energy = jnp.einsum('bqd,bkd->bqk', qb[:, :, sl], kb[:, :, sl],
                            preferred_element_type=jnp.float32)   # (b, S, S)
        if seq_valid < S:                      # mask padded key positions
            kidx = jax.lax.broadcasted_iota(jnp.int32, (b_tile, S, S), 2)
            energy = jnp.where(kidx < seq_valid, energy, -1e30)
        m = jnp.max(energy, axis=-1, keepdims=True)
        p = jnp.exp(energy - m)
        attn = p * pl.reciprocal(jnp.sum(p, axis=-1, keepdims=True), approx=True)
        ho = jnp.einsum('bqk,bkd->bqd', attn.astype(MM_DTYPE), kb[:, :, sl],
                        preferred_element_type=jnp.float32)        # (b, S, D)
        att_ref[:, :, sl] = ho                 # lane-offset store of head output

    # --- fc_out: one full-contraction-depth (rows, E) @ (E, E) matmul ---
    att_rows = att_ref[...].reshape(rows, E).astype(MM_DTYPE)
    att_fc = jnp.dot(att_rows, wo, preferred_element_type=jnp.float32)

    xn = _layernorm(att_fc + x2, g1_ref[0], be1_ref[0])            # norm1 (f32)

    h1 = jnp.dot(xn.astype(MM_DTYPE), w1,
                 preferred_element_type=jnp.float32) + bb1_ref[0]
    h1 = jnp.maximum(h1, 0.0)                                      # ReLU
    ff = jnp.dot(h1.astype(MM_DTYPE), w2,
                 preferred_element_type=jnp.float32) + bb2_ref[0]

    out = _layernorm(ff + xn, g2_ref[0], be2_ref[0])               # norm2 (f32)
    o_ref[...] = out.reshape(b_tile, S, E)


def _vmem_capacity_bytes():
    try:
        return int(pltpu.get_tpu_info().vmem_capacity_bytes)
    except Exception:
        return 64 * 1024 * 1024   # conservative (v7x per-TC) fallback


def _pick_b_tile(n, s, target_rows):
    """Largest divisor of n with b_tile*s <= target_rows.  Prefers >=2 batch
    tiles (so the parallel batch axis can shard across TensorCores) and an
    EVEN number of batch tiles (balanced v7x megacore shards)."""
    target = max(1, target_rows // s)
    divisors = [d for d in range(1, n + 1) if n % d == 0]
    feasible = [d for d in divisors if d <= target] or [1]
    multi = [d for d in feasible if n // d >= 2]
    pool = multi if multi else feasible
    even_nb = [d for d in pool if (n // d) % 2 == 0]
    return max(even_nb) if even_nb else max(pool)


def encoder_layers(x, params, heads, seq_valid):
    """Run all Transformer_block layers in a single fused pallas_call."""
    N, S, E = x.shape
    L, _, F = params["w1"].shape

    vmem_cap = _vmem_capacity_bytes()
    # 128-MiB chips (v5e/v6e): bigger batch tile amortizes weight re-DMA.
    target_rows = 512 if vmem_cap >= 96 * 1024 * 1024 else 256
    b_tile = _pick_b_tile(N, S, target_rows)
    nb = N // b_tile

    kernel = functools.partial(encoder_layers_kernel, heads=heads,
                               embed_size=E, b_tile=b_tile, seq=S,
                               seq_valid=seq_valid)

    # Ship weights as bf16 (halves HBM/VMEM traffic; MXU accumulates in f32).
    wo = params["wo"].astype(MM_DTYPE)
    w1 = params["w1"].astype(MM_DTYPE)
    w2 = params["w2"].astype(MM_DTYPE)

    flops = 2 * N * L * S * E * (2 * S + E + 2 * F)
    transcendentals = N * L * heads * S * S
    w_bytes = 2 * (E * E + 2 * E * F) + 4 * (5 * E + F)   # bf16 mats + f32 LN/bias
    bytes_accessed = 8 * N * S * E + nb * L * w_bytes
    cost = pl.CostEstimate(flops=flops, transcendentals=transcendentals,
                           bytes_accessed=bytes_accessed)

    # Per-step VMEM: double-buffered weights, BOTH activation blocks (x input
    # and resident output) double-buffered, plus the f32 head-output scratch.
    act_block = 4 * b_tile * S * E
    per_step = 2 * w_bytes + 2 * 2 * act_block + act_block
    vmem_limit = int(min(0.85 * vmem_cap,
                         max(32 * 1024 * 1024, 1.5 * per_step)))
    # TODO(synk): for very large E/F (per-layer bf16 weights > ~12-16 MiB) tile
    # the FFN hidden dim F (extra grid axis or pltpu.emit_pipeline) so next-layer
    # weight double-buffering still fits v7x's 64 MiB VMEM.

    return pl.pallas_call(
        kernel,
        out_shape=jax.ShapeDtypeStruct((N, S, E), jnp.float32),
        grid=(nb, L),
        in_specs=[
            pl.BlockSpec((b_tile, S, E), lambda b, l: (b, 0, 0)),   # x (layer-0 input)
            pl.BlockSpec((1, E, E), lambda b, l: (l, 0, 0)),        # wo
            pl.BlockSpec((1, 1, E), lambda b, l: (l, 0, 0)),        # gamma1
            pl.BlockSpec((1, 1, E), lambda b, l: (l, 0, 0)),        # beta1
            pl.BlockSpec((1, E, F), lambda b, l: (l, 0, 0)),        # w1
            pl.BlockSpec((1, 1, F), lambda b, l: (l, 0, 0)),        # b1
            pl.BlockSpec((1, F, E), lambda b, l: (l, 0, 0)),        # w2
            pl.BlockSpec((1, 1, E), lambda b, l: (l, 0, 0)),        # b2
            pl.BlockSpec((1, 1, E), lambda b, l: (l, 0, 0)),        # gamma2
            pl.BlockSpec((1, 1, E), lambda b, l: (l, 0, 0)),        # beta2
        ],
        out_specs=pl.BlockSpec((b_tile, S, E), lambda b, l: (b, 0, 0)),
        scratch_shapes=[pltpu.VMEM((b_tile, S, E), jnp.float32)],   # head outputs
        compiler_params=pltpu.CompilerParams(
            dimension_semantics=("parallel", "arbitrary"),
            vmem_limit_bytes=vmem_limit),
        cost_estimate=cost,
    )(x, wo, params["g1"], params["be1"], w1, params["bb1"], w2,
      params["bb2"], params["g2"], params["be2"])


def encoder_forward(tokens, params, heads):
    """Encoder.forward(x, mask=None). tokens: (N, S) int32."""
    N, S = tokens.shape
    # Embedding gather stays in XLA (data-dependent gather outside the kernel).
    seq_emb = jnp.take(params["seq_embedding"], tokens, axis=0)        # (N, S, E)
    pos_emb = params["position_embedding"][:S]                         # (S, E)
    out = seq_emb + pos_emb[None, :, :]                                # dropout p=0 -> identity

    # Pad the sequence dim to a multiple of 8 sublanes (padded keys are masked
    # inside the kernel; padded query rows are sliced away here).
    s_pad = -(-S // 8) * 8
    if s_pad != S:
        out = jnp.pad(out, ((0, 0), (0, s_pad - S), (0, 0)))
    y = encoder_layers(out, params, heads, seq_valid=S)
    return y[:, :S, :] if s_pad != S else y


def init_encoder_params(key, src_size, embed_size, num_layers, forward_expansion,
                        max_length):
    F = forward_expansion * embed_size
    keys = jax.random.split(key, 7)

    def norm(k, shape, scale=0.02):
        return (scale * jax.random.normal(k, shape)).astype(jnp.float32)

    return {
        "seq_embedding": norm(keys[0], (src_size, embed_size), 1.0),
        "position_embedding": norm(keys[1], (max_length, embed_size), 1.0),
        # Per-layer weights stacked along a leading layer axis.
        "wo": norm(keys[2], (num_layers, embed_size, embed_size)),     # fc_out (in x out)
        "g1": jnp.ones((num_layers, 1, embed_size), jnp.float32),
        "be1": jnp.zeros((num_layers, 1, embed_size), jnp.float32),
        "w1": norm(keys[3], (num_layers, embed_size, F)),
        "bb1": norm(keys[4], (num_layers, 1, F)),
        "w2": norm(keys[5], (num_layers, F, embed_size)),
        "bb2": norm(keys[6], (num_layers, 1, embed_size)),
        "g2": jnp.ones((num_layers, 1, embed_size), jnp.float32),
        "be2": jnp.zeros((num_layers, 1, embed_size), jnp.float32),
    }


if __name__ == "__main__":
    # Small, forward-consistent shapes.
    N, S = 2, 8
    src_size = 50
    embed_size = 128
    heads = 4                 # head_dim = 32
    num_layers = 2
    forward_expansion = 2     # FFN hidden = 256
    max_length = 64

    key = jax.random.PRNGKey(0)
    k_tok, k_par = jax.random.split(key)
    tokens = jax.random.randint(k_tok, (N, S), 0, src_size, dtype=jnp.int32)
    params = init_encoder_params(k_par, src_size, embed_size, num_layers,
                                 forward_expansion, max_length)

    out = encoder_forward(tokens, params, heads)
    out = jax.block_until_ready(out)
    assert out.shape == (N, S, embed_size)
    assert bool(jnp.all(jnp.isfinite(out)))
    print("KERNEL_OK")
</pallas_src>

<mosaic_0001>
module attributes {stable_mosaic.version = 11 : i64} {
  func.func @encoder_layers_kernel(%arg0: i32, %arg1: i32, %arg2: memref<1x8x128xf32, #tpu.memory_space<vmem>>, %arg3: memref<1x128x128xbf16, #tpu.memory_space<vmem>>, %arg4: memref<1x1x128xf32, #tpu.memory_space<vmem>>, %arg5: memref<1x1x128xf32, #tpu.memory_space<vmem>>, %arg6: memref<1x128x256xbf16, #tpu.memory_space<vmem>>, %arg7: memref<1x1x256xf32, #tpu.memory_space<vmem>>, %arg8: memref<1x256x128xbf16, #tpu.memory_space<vmem>>, %arg9: memref<1x1x128xf32, #tpu.memory_space<vmem>>, %arg10: memref<1x1x128xf32, #tpu.memory_space<vmem>>, %arg11: memref<1x1x128xf32, #tpu.memory_space<vmem>>, %arg12: memref<1x8x128xf32, #tpu.memory_space<vmem>>, %arg13: memref<1x8x128xf32, #tpu.memory_space<vmem>>) attributes {dimension_semantics = [#tpu.dimension_semantics<parallel>, #tpu.dimension_semantics<arbitrary>], iteration_bounds = array<i64: 2, 2>, scalar_prefetch = 0 : i64, scratch_operands = 1 : i64, tpu.core_type = #tpu.core_type<tc>, window_params = [{transform_indices = @transform_0, window_bounds = array<i64: 1, 8, 128>}, {transform_indices = @transform_1, window_bounds = array<i64: 1, 128, 128>}, {transform_indices = @transform_2, window_bounds = array<i64: 1, 1, 128>}, {transform_indices = @transform_3, window_bounds = array<i64: 1, 1, 128>}, {transform_indices = @transform_4, window_bounds = array<i64: 1, 128, 256>}, {transform_indices = @transform_5, window_bounds = array<i64: 1, 1, 256>}, {transform_indices = @transform_6, window_bounds = array<i64: 1, 256, 128>}, {transform_indices = @transform_7, window_bounds = array<i64: 1, 1, 128>}, {transform_indices = @transform_8, window_bounds = array<i64: 1, 1, 128>}, {transform_indices = @transform_9, window_bounds = array<i64: 1, 1, 128>}, {transform_indices = @transform_10, window_bounds = array<i64: 1, 8, 128>}]} {
    %c0_i32 = arith.constant 0 : i32
    %0 = arith.cmpi eq, %arg1, %c0_i32 : i32
    %1 = arith.extui %0 : i1 to i32
    %c0_i32_0 = arith.constant 0 : i32
    %2 = arith.cmpi ne, %1, %c0_i32_0 : i32
    scf.if %2 {
      %c0_75 = arith.constant 0 : index
      %c0_76 = arith.constant 0 : index
      %c0_77 = arith.constant 0 : index
      %157 = vector.load %arg2[%c0_75, %c0_76, %c0_77] : memref<1x8x128xf32, #tpu.memory_space<vmem>>, vector<1x8x128xf32>
      %c0_78 = arith.constant 0 : index
      %c0_79 = arith.constant 0 : index
      %c0_80 = arith.constant 0 : index
      %158 = vector.load %arg12[%c0_78, %c0_79, %c0_80] : memref<1x8x128xf32, #tpu.memory_space<vmem>>, vector<1x8x128xf32>
      tpu.vector_store %arg12[%c0_78, %c0_79, %c0_80], %157 {strides = array<i32>} : memref<1x8x128xf32, #tpu.memory_space<vmem>>, vector<1x8x128xf32>,
    } else {
    }
    %c0 = arith.constant 0 : index
    %c0_1 = arith.constant 0 : index
    %c0_2 = arith.constant 0 : index
    %3 = vector.load %arg12[%c0, %c0_1, %c0_2] : memref<1x8x128xf32, #tpu.memory_space<vmem>>, vector<1x8x128xf32>
    %4 = vector.shape_cast %3 : vector<1x8x128xf32> to vector<8x128xf32>
    %cst = arith.constant 11.3137083 : f32
    %5 = vector.broadcast %cst : f32 to vector<1x8x128xf32>
    %6 = arith.mulf %3, %5 : vector<1x8x128xf32>
    %7 = arith.truncf %6 : vector<1x8x128xf32> to vector<1x8x128xbf16>
    %8 = arith.truncf %3 : vector<1x8x128xf32> to vector<1x8x128xbf16>
    %c0_3 = arith.constant 0 : index
    %c0_4 = arith.constant 0 : index
    %c0_5 = arith.constant 0 : index
    %9 = vector.load %arg3[%c0_3, %c0_4, %c0_5] : memref<1x128x128xbf16, #tpu.memory_space<vmem>>, vector<1x128x128xbf16>
    %10 = vector.shape_cast %9 : vector<1x128x128xbf16> to vector<128x128xbf16>
    %c0_6 = arith.constant 0 : index
    %c0_7 = arith.constant 0 : index
    %c0_8 = arith.constant 0 : index
    %11 = vector.load %arg6[%c0_6, %c0_7, %c0_8] : memref<1x128x256xbf16, #tpu.memory_space<vmem>>, vector<1x128x256xbf16>
    %12 = vector.shape_cast %11 : vector<1x128x256xbf16> to vector<128x256xbf16>
    %c0_9 = arith.constant 0 : index
    %c0_10 = arith.constant 0 : index
    %c0_11 = arith.constant 0 : index
    %13 = vector.load %arg8[%c0_9, %c0_10, %c0_11] : memref<1x256x128xbf16, #tpu.memory_space<vmem>>, vector<1x256x128xbf16>
    %14 = vector.shape_cast %13 : vector<1x256x128xbf16> to vector<256x128xbf16>
    %15 = vector.extract_strided_slice %7 {offsets = [0, 0, 0], sizes = [1, 8, 32], strides = [1, 1, 1]} : vector<1x8x128xbf16> to vector<1x8x32xbf16>
    %16 = vector.extract_strided_slice %8 {offsets = [0, 0, 0], sizes = [1, 8, 32], strides = [1, 1, 1]} : vector<1x8x128xbf16> to vector<1x8x32xbf16>
    "tpu.trace_start"() <{level = 10 : i32, message = "bqd,bkd->bqk"}> : () -> ()
    %cst_12 = arith.constant dense<0.000000e+00> : vector<1x8x8xf32>
    %17 = tpu.matmul %15, %16, %cst_12 {dimension_numbers = #tpu.dot_dimension_numbers<[2], [2], [1], [1], [0, 0, 0, 1, 1, 1], [0], [0]>} : vector<1x8x32xbf16>, vector<1x8x32xbf16>, vector<1x8x8xf32> -> vector<1x8x8xf32>
    "tpu.trace_stop"() : () -> ()
    %cst_13 = arith.constant dense<0xFF800000> : vector<1x8xf32>
    %18 = vector.multi_reduction <maximumf>, %17, %cst_13 [2] : vector<1x8x8xf32> to vector<1x8xf32>
    %19 = vector.shape_cast %18 : vector<1x8xf32> to vector<1x8x1xf32>
    %20 = vector.broadcast %19 : vector<1x8x1xf32> to vector<1x8x8xf32>
    %21 = arith.subf %17, %20 : vector<1x8x8xf32>
    %22 = math.exp %21 : vector<1x8x8xf32>
    %cst_14 = arith.constant dense<0.000000e+00> : vector<1x8xf32>
    %23 = vector.multi_reduction <add>, %22, %cst_14 [2] : vector<1x8x8xf32> to vector<1x8xf32>
    %24 = vector.shape_cast %23 : vector<1x8xf32> to vector<1x8x1xf32>
    %25 = tpu.reciprocal %24 {approx = true} : vector<1x8x1xf32> -> vector<1x8x1xf32>
    %26 = vector.broadcast %25 : vector<1x8x1xf32> to vector<1x8x8xf32>
    %27 = arith.mulf %22, %26 : vector<1x8x8xf32>
    %28 = arith.truncf %27 : vector<1x8x8xf32> to vector<1x8x8xbf16>
    %29 = vector.extract_strided_slice %8 {offsets = [0, 0, 0], sizes = [1, 8, 32], strides = [1, 1, 1]} : vector<1x8x128xbf16> to vector<1x8x32xbf16>
    "tpu.trace_start"() <{level = 10 : i32, message = "bqk,bkd->bqd"}> : () -> ()
    %cst_15 = arith.constant dense<0.000000e+00> : vector<1x8x32xf32>
    %30 = tpu.matmul %28, %29, %cst_15 {dimension_numbers = #tpu.dot_dimension_numbers<[2], [1], [1], [2], [0, 0, 0, 1, 1, 2], [0], [0]>} : vector<1x8x8xbf16>, vector<1x8x32xbf16>, vector<1x8x32xf32> -> vector<1x8x32xf32>
    "tpu.trace_stop"() : () -> ()
    %c0_16 = arith.constant 0 : index
    %c0_17 = arith.constant 0 : index
    %c0_18 = arith.constant 0 : index
    %31 = vector.load %arg13[%c0_16, %c0_17, %c0_18] : memref<1x8x128xf32, #tpu.memory_space<vmem>>, vector<1x8x32xf32>
    tpu.vector_store %arg13[%c0_16, %c0_17, %c0_18], %30 {strides = array<i32>} : memref<1x8x128xf32, #tpu.memory_space<vmem>>, vector<1x8x32xf32>,
    %32 = vector.extract_strided_slice %7 {offsets = [0, 0, 32], sizes = [1, 8, 32], strides = [1, 1, 1]} : vector<1x8x128xbf16> to vector<1x8x32xbf16>
    %33 = vector.extract_strided_slice %8 {offsets = [0, 0, 32], sizes = [1, 8, 32], strides = [1, 1, 1]} : vector<1x8x128xbf16> to vector<1x8x32xbf16>
    "tpu.trace_start"() <{level = 10 : i32, message = "bqd,bkd->bqk"}> : () -> ()
    %cst_19 = arith.constant dense<0.000000e+00> : vector<1x8x8xf32>
    %34 = tpu.matmul %32, %33, %cst_19 {dimension_numbers = #tpu.dot_dimension_numbers<[2], [2], [1], [1], [0, 0, 0, 1, 1, 1], [0], [0]>} : vector<1x8x32xbf16>, vector<1x8x32xbf16>, vector<1x8x8xf32> -> vector<1x8x8xf32>
    "tpu.trace_stop"() : () -> ()
    %cst_20 = arith.constant dense<0xFF800000> : vector<1x8xf32>
    %35 = vector.multi_reduction <maximumf>, %34, %cst_20 [2] : vector<1x8x8xf32> to vector<1x8xf32>
    %36 = vector.shape_cast %35 : vector<1x8xf32> to vector<1x8x1xf32>
    %37 = vector.broadcast %36 : vector<1x8x1xf32> to vector<1x8x8xf32>
    %38 = arith.subf %34, %37 : vector<1x8x8xf32>
    %39 = math.exp %38 : vector<1x8x8xf32>
    %cst_21 = arith.constant dense<0.000000e+00> : vector<1x8xf32>
    %40 = vector.multi_reduction <add>, %39, %cst_21 [2] : vector<1x8x8xf32> to vector<1x8xf32>
    %41 = vector.shape_cast %40 : vector<1x8xf32> to vector<1x8x1xf32>
    %42 = tpu.reciprocal %41 {approx = true} : vector<1x8x1xf32> -> vector<1x8x1xf32>
    %43 = vector.broadcast %42 : vector<1x8x1xf32> to vector<1x8x8xf32>
    %44 = arith.mulf %39, %43 : vector<1x8x8xf32>
    %45 = arith.truncf %44 : vector<1x8x8xf32> to vector<1x8x8xbf16>
    %46 = vector.extract_strided_slice %8 {offsets = [0, 0, 32], sizes = [1, 8, 32], strides = [1, 1, 1]} : vector<1x8x128xbf16> to vector<1x8x32xbf16>
    "tpu.trace_start"() <{level = 10 : i32, message = "bqk,bkd->bqd"}> : () -> ()
    %cst_22 = arith.constant dense<0.000000e+00> : vector<1x8x32xf32>
    %47 = tpu.matmul %45, %46, %cst_22 {dimension_numbers = #tpu.dot_dimension_numbers<[2], [1], [1], [2], [0, 0, 0, 1, 1, 2], [0], [0]>} : vector<1x8x8xbf16>, vector<1x8x32xbf16>, vector<1x8x32xf32> -> vector<1x8x32xf32>
    "tpu.trace_stop"() : () -> ()
    %c0_23 = arith.constant 0 : index
    %c0_24 = arith.constant 0 : index
    %c32 = arith.constant 32 : index
    %48 = vector.load %arg13[%c0_23, %c0_24, %c32] : memref<1x8x128xf32, #tpu.memory_space<vmem>>, vector<1x8x32xf32>
    tpu.vector_store %arg13[%c0_23, %c0_24, %c32], %47 {strides = array<i32>} : memref<1x8x128xf32, #tpu.memory_space<vmem>>, vector<1x8x32xf32>,
    %49 = vector.extract_strided_slice %7 {offsets = [0, 0, 64], sizes = [1, 8, 32], strides = [1, 1, 1]} : vector<1x8x128xbf16> to vector<1x8x32xbf16>
    %50 = vector.extract_strided_slice %8 {offsets = [0, 0, 64], sizes = [1, 8, 32], strides = [1, 1, 1]} : vector<1x8x128xbf16> to vector<1x8x32xbf16>
    "tpu.trace_start"() <{level = 10 : i32, message = "bqd,bkd->bqk"}> : () -> ()
    %cst_25 = arith.constant dense<0.000000e+00> : vector<1x8x8xf32>
    %51 = tpu.matmul %49, %50, %cst_25 {dimension_numbers = #tpu.dot_dimension_numbers<[2], [2], [1], [1], [0, 0, 0, 1, 1, 1], [0], [0]>} : vector<1x8x32xbf16>, vector<1x8x32xbf16>, vector<1x8x8xf32> -> vector<1x8x8xf32>
    "tpu.trace_stop"() : () -> ()
    %cst_26 = arith.constant dense<0xFF800000> : vector<1x8xf32>
    %52 = vector.multi_reduction <maximumf>, %51, %cst_26 [2] : vector<1x8x8xf32> to vector<1x8xf32>
    %53 = vector.shape_cast %52 : vector<1x8xf32> to vector<1x8x1xf32>
    %54 = vector.broadcast %53 : vector<1x8x1xf32> to vector<1x8x8xf32>
    %55 = arith.subf %51, %54 : vector<1x8x8xf32>
    %56 = math.exp %55 : vector<1x8x8xf32>
    %cst_27 = arith.constant dense<0.000000e+00> : vector<1x8xf32>
    %57 = vector.multi_reduction <add>, %56, %cst_27 [2] : vector<1x8x8xf32> to vector<1x8xf32>
    %58 = vector.shape_cast %57 : vector<1x8xf32> to vector<1x8x1xf32>
    %59 = tpu.reciprocal %58 {approx = true} : vector<1x8x1xf32> -> vector<1x8x1xf32>
    %60 = vector.broadcast %59 : vector<1x8x1xf32> to vector<1x8x8xf32>
    %61 = arith.mulf %56, %60 : vector<1x8x8xf32>
    %62 = arith.truncf %61 : vector<1x8x8xf32> to vector<1x8x8xbf16>
    %63 = vector.extract_strided_slice %8 {offsets = [0, 0, 64], sizes = [1, 8, 32], strides = [1, 1, 1]} : vector<1x8x128xbf16> to vector<1x8x32xbf16>
    "tpu.trace_start"() <{level = 10 : i32, message = "bqk,bkd->bqd"}> : () -> ()
    %cst_28 = arith.constant dense<0.000000e+00> : vector<1x8x32xf32>
    %64 = tpu.matmul %62, %63, %cst_28 {dimension_numbers = #tpu.dot_dimension_numbers<[2], [1], [1], [2], [0, 0, 0, 1, 1, 2], [0], [0]>} : vector<1x8x8xbf16>, vector<1x8x32xbf16>, vector<1x8x32xf32> -> vector<1x8x32xf32>
    "tpu.trace_stop"() : () -> ()
    %c0_29 = arith.constant 0 : index
    %c0_30 = arith.constant 0 : index
    %c64 = arith.constant 64 : index
    %65 = vector.load %arg13[%c0_29, %c0_30, %c64] : memref<1x8x128xf32, #tpu.memory_space<vmem>>, vector<1x8x32xf32>
    tpu.vector_store %arg13[%c0_29, %c0_30, %c64], %64 {strides = array<i32>} : memref<1x8x128xf32, #tpu.memory_space<vmem>>, vector<1x8x32xf32>,
    %66 = vector.extract_strided_slice %7 {offsets = [0, 0, 96], sizes = [1, 8, 32], strides = [1, 1, 1]} : vector<1x8x128xbf16> to vector<1x8x32xbf16>
    %67 = vector.extract_strided_slice %8 {offsets = [0, 0, 96], sizes = [1, 8, 32], strides = [1, 1, 1]} : vector<1x8x128xbf16> to vector<1x8x32xbf16>
    "tpu.trace_start"() <{level = 10 : i32, message = "bqd,bkd->bqk"}> : () -> ()
    %cst_31 = arith.constant dense<0.000000e+00> : vector<1x8x8xf32>
    %68 = tpu.matmul %66, %67, %cst_31 {dimension_numbers = #tpu.dot_dimension_numbers<[2], [2], [1], [1], [0, 0, 0, 1, 1, 1], [0], [0]>} : vector<1x8x32xbf16>, vector<1x8x32xbf16>, vector<1x8x8xf32> -> vector<1x8x8xf32>
    "tpu.trace_stop"() : () -> ()
    %cst_32 = arith.constant dense<0xFF800000> : vector<1x8xf32>
    %69 = vector.multi_reduction <maximumf>, %68, %cst_32 [2] : vector<1x8x8xf32> to vector<1x8xf32>
    %70 = vector.shape_cast %69 : vector<1x8xf32> to vector<1x8x1xf32>
    %71 = vector.broadcast %70 : vector<1x8x1xf32> to vector<1x8x8xf32>
    %72 = arith.subf %68, %71 : vector<1x8x8xf32>
    %73 = math.exp %72 : vector<1x8x8xf32>
    %cst_33 = arith.constant dense<0.000000e+00> : vector<1x8xf32>
    %74 = vector.multi_reduction <add>, %73, %cst_33 [2] : vector<1x8x8xf32> to vector<1x8xf32>
    %75 = vector.shape_cast %74 : vector<1x8xf32> to vector<1x8x1xf32>
    %76 = tpu.reciprocal %75 {approx = true} : vector<1x8x1xf32> -> vector<1x8x1xf32>
    %77 = vector.broadcast %76 : vector<1x8x1xf32> to vector<1x8x8xf32>
    %78 = arith.mulf %73, %77 : vector<1x8x8xf32>
    %79 = arith.truncf %78 : vector<1x8x8xf32> to vector<1x8x8xbf16>
    %80 = vector.extract_strided_slice %8 {offsets = [0, 0, 96], sizes = [1, 8, 32], strides = [1, 1, 1]} : vector<1x8x128xbf16> to vector<1x8x32xbf16>
    "tpu.trace_start"() <{level = 10 : i32, message = "bqk,bkd->bqd"}> : () -> ()
    %cst_34 = arith.constant dense<0.000000e+00> : vector<1x8x32xf32>
    %81 = tpu.matmul %79, %80, %cst_34 {dimension_numbers = #tpu.dot_dimension_numbers<[2], [1], [1], [2], [0, 0, 0, 1, 1, 2], [0], [0]>} : vector<1x8x8xbf16>, vector<1x8x32xbf16>, vector<1x8x32xf32> -> vector<1x8x32xf32>
    "tpu.trace_stop"() : () -> ()
    %c0_35 = arith.constant 0 : index
    %c0_36 = arith.constant 0 : index
    %c96 = arith.constant 96 : index
    %82 = vector.load %arg13[%c0_35, %c0_36, %c96] : memref<1x8x128xf32, #tpu.memory_space<vmem>>, vector<1x8x32xf32>
    tpu.vector_store %arg13[%c0_35, %c0_36, %c96], %81 {strides = array<i32>} : memref<1x8x128xf32, #tpu.memory_space<vmem>>, vector<1x8x32xf32>,
    %c0_37 = arith.constant 0 : index
    %c0_38 = arith.constant 0 : index
    %c0_39 = arith.constant 0 : index
    %83 = vector.load %arg13[%c0_37, %c0_38, %c0_39] : memref<1x8x128xf32, #tpu.memory_space<vmem>>, vector<1x8x128xf32>
    %84 = vector.shape_cast %83 : vector<1x8x128xf32> to vector<8x128xf32>
    %85 = arith.truncf %84 : vector<8x128xf32> to vector<8x128xbf16>
    %cst_40 = arith.constant dense<0.000000e+00> : vector<8x128xf32>
    %86 = tpu.matmul %85, %10, %cst_40 {dimension_numbers = #tpu.dot_dimension_numbers<[1], [0], [0], [1], [0, 0, 1, 1], [], []>} : vector<8x128xbf16>, vector<128x128xbf16>, vector<8x128xf32> -> vector<8x128xf32>
    %87 = arith.addf %86, %4 : vector<8x128xf32>
    %c0_41 = arith.constant 0 : index
    %c0_42 = arith.constant 0 : index
    %c0_43 = arith.constant 0 : index
    %88 = vector.load %arg4[%c0_41, %c0_42, %c0_43] : memref<1x1x128xf32, #tpu.memory_space<vmem>>, vector<1x1x128xf32>
    %89 = vector.shape_cast %88 : vector<1x1x128xf32> to vector<1x128xf32>
    %c0_44 = arith.constant 0 : index
    %c0_45 = arith.constant 0 : index
    %c0_46 = arith.constant 0 : index
    %90 = vector.load %arg5[%c0_44, %c0_45, %c0_46] : memref<1x1x128xf32, #tpu.memory_space<vmem>>, vector<1x1x128xf32>
    %91 = vector.shape_cast %90 : vector<1x1x128xf32> to vector<1x128xf32>
    %cst_47 = arith.constant dense<0.000000e+00> : vector<8xf32>
    %92 = vector.multi_reduction <add>, %87, %cst_47 [1] : vector<8x128xf32> to vector<8xf32>
    %93 = vector.shape_cast %92 : vector<8xf32> to vector<8x1xf32>
    %cst_48 = arith.constant 1.280000e+02 : f32
    %94 = vector.broadcast %cst_48 : f32 to vector<8x1xf32>
    %95 = arith.divf %93, %94 : vector<8x1xf32>
    %96 = vector.broadcast %95 : vector<8x1xf32> to vector<8x128xf32>
    %97 = arith.subf %87, %96 : vector<8x128xf32>
    %98 = arith.mulf %97, %97 : vector<8x128xf32>
    %cst_49 = arith.constant dense<0.000000e+00> : vector<8xf32>
    %99 = vector.multi_reduction <add>, %98, %cst_49 [1] : vector<8x128xf32> to vector<8xf32>
    %100 = vector.shape_cast %99 : vector<8xf32> to vector<8x1xf32>
    %cst_50 = arith.constant 1.280000e+02 : f32
    %101 = vector.broadcast %cst_50 : f32 to vector<8x1xf32>
    %102 = arith.divf %100, %101 : vector<8x1xf32>
    %103 = vector.broadcast %95 : vector<8x1xf32> to vector<8x128xf32>
    %104 = arith.subf %87, %103 : vector<8x128xf32>
    %cst_51 = arith.constant 9.99999974E-6 : f32
    %105 = vector.broadcast %cst_51 : f32 to vector<8x1xf32>
    %106 = arith.addf %102, %105 : vector<8x1xf32>
    %107 = math.rsqrt %106 : vector<8x1xf32>
    %108 = vector.broadcast %107 : vector<8x1xf32> to vector<8x128xf32>
    %109 = arith.mulf %104, %108 : vector<8x128xf32>
    %110 = vector.broadcast %89 : vector<1x128xf32> to vector<8x128xf32>
    %111 = arith.mulf %109, %110 : vector<8x128xf32>
    %112 = vector.broadcast %91 : vector<1x128xf32> to vector<8x128xf32>
    %113 = arith.addf %111, %112 : vector<8x128xf32>
    %114 = arith.truncf %113 : vector<8x128xf32> to vector<8x128xbf16>
    %cst_52 = arith.constant dense<0.000000e+00> : vector<8x256xf32>
    %115 = tpu.matmul %114, %12, %cst_52 {dimension_numbers = #tpu.dot_dimension_numbers<[1], [0], [0], [1], [0, 0, 1, 1], [], []>} : vector<8x128xbf16>, vector<128x256xbf16>, vector<8x256xf32> -> vector<8x256xf32>
    %c0_53 = arith.constant 0 : index
    %c0_54 = arith.constant 0 : index
    %c0_55 = arith.constant 0 : index
    %116 = vector.load %arg7[%c0_53, %c0_54, %c0_55] : memref<1x1x256xf32, #tpu.memory_space<vmem>>, vector<1x1x256xf32>
    %117 = vector.shape_cast %116 : vector<1x1x256xf32> to vector<1x256xf32>
    %118 = vector.broadcast %117 : vector<1x256xf32> to vector<8x256xf32>
    %119 = arith.addf %115, %118 : vector<8x256xf32>
    %cst_56 = arith.constant 0.000000e+00 : f32
    %120 = vector.broadcast %cst_56 : f32 to vector<8x256xf32>
    %121 = arith.maximumf %119, %120 : vector<8x256xf32>
    %122 = arith.truncf %121 : vector<8x256xf32> to vector<8x256xbf16>
    %cst_57 = arith.constant dense<0.000000e+00> : vector<8x128xf32>
    %123 = tpu.matmul %122, %14, %cst_57 {dimension_numbers = #tpu.dot_dimension_numbers<[1], [0], [0], [1], [0, 0, 1, 1], [], []>} : vector<8x256xbf16>, vector<256x128xbf16>, vector<8x128xf32> -> vector<8x128xf32>
    %c0_58 = arith.constant 0 : index
    %c0_59 = arith.constant 0 : index
    %c0_60 = arith.constant 0 : index
    %124 = vector.load %arg9[%c0_58, %c0_59, %c0_60] : memref<1x1x128xf32, #tpu.memory_space<vmem>>, vector<1x1x128xf32>
    %125 = vector.shape_cast %124 : vector<1x1x128xf32> to vector<1x128xf32>
    %126 = vector.broadcast %125 : vector<1x128xf32> to vector<8x128xf32>
    %127 = arith.addf %123, %126 : vector<8x128xf32>
    %128 = arith.addf %127, %113 : vector<8x128xf32>
    %c0_61 = arith.constant 0 : index
    %c0_62 = arith.constant 0 : index
    %c0_63 = arith.constant 0 : index
    %129 = vector.load %arg10[%c0_61, %c0_62, %c0_63] : memref<1x1x128xf32, #tpu.memory_space<vmem>>, vector<1x1x128xf32>
    %130 = vector.shape_cast %129 : vector<1x1x128xf32> to vector<1x128xf32>
    %c0_64 = arith.constant 0 : index
    %c0_65 = arith.constant 0 : index
    %c0_66 = arith.constant 0 : index
    %131 = vector.load %arg11[%c0_64, %c0_65, %c0_66] : memref<1x1x128xf32, #tpu.memory_space<vmem>>, vector<1x1x128xf32>
    %132 = vector.shape_cast %131 : vector<1x1x128xf32> to vector<1x128xf32>
    %cst_67 = arith.constant dense<0.000000e+00> : vector<8xf32>
    %133 = vector.multi_reduction <add>, %128, %cst_67 [1] : vector<8x128xf32> to vector<8xf32>
    %134 = vector.shape_cast %133 : vector<8xf32> to vector<8x1xf32>
    %cst_68 = arith.constant 1.280000e+02 : f32
    %135 = vector.broadcast %cst_68 : f32 to vector<8x1xf32>
    %136 = arith.divf %134, %135 : vector<8x1xf32>
    %137 = vector.broadcast %136 : vector<8x1xf32> to vector<8x128xf32>
    %138 = arith.subf %128, %137 : vector<8x128xf32>
    %139 = arith.mulf %138, %138 : vector<8x128xf32>
    %cst_69 = arith.constant dense<0.000000e+00> : vector<8xf32>
    %140 = vector.multi_reduction <add>, %139, %cst_69 [1] : vector<8x128xf32> to vector<8xf32>
    %141 = vector.shape_cast %140 : vector<8xf32> to vector<8x1xf32>
    %cst_70 = arith.constant 1.280000e+02 : f32
    %142 = vector.broadcast %cst_70 : f32 to vector<8x1xf32>
    %143 = arith.divf %141, %142 : vector<8x1xf32>
    %144 = vector.broadcast %136 : vector<8x1xf32> to vector<8x128xf32>
    %145 = arith.subf %128, %144 : vector<8x128xf32>
    %cst_71 = arith.constant 9.99999974E-6 : f32
    %146 = vector.broadcast %cst_71 : f32 to vector<8x1xf32>
    %147 = arith.addf %143, %146 : vector<8x1xf32>
    %148 = math.rsqrt %147 : vector<8x1xf32>
    %149 = vector.broadcast %148 : vector<8x1xf32> to vector<8x128xf32>
    %150 = arith.mulf %145, %149 : vector<8x128xf32>
    %151 = vector.broadcast %130 : vector<1x128xf32> to vector<8x128xf32>
    %152 = arith.mulf %150, %151 : vector<8x128xf32>
    %153 = vector.broadcast %132 : vector<1x128xf32> to vector<8x128xf32>
    %154 = arith.addf %152, %153 : vector<8x128xf32>
    %155 = vector.shape_cast %154 : vector<8x128xf32> to vector<1x8x128xf32>
    %c0_72 = arith.constant 0 : index
    %c0_73 = arith.constant 0 : index
    %c0_74 = arith.constant 0 : index
    %156 = vector.load %arg12[%c0_72, %c0_73, %c0_74] : memref<1x8x128xf32, #tpu.memory_space<vmem>>, vector<1x8x128xf32>
    tpu.vector_store %arg12[%c0_72, %c0_73, %c0_74], %155 {strides = array<i32>} : memref<1x8x128xf32, #tpu.memory_space<vmem>>, vector<1x8x128xf32>,
    return
  }
  func.func @transform_0(%arg0: i32, %arg1: i32) -> (i32, i32, i32) {
    %c0_i32 = arith.constant 0 : i32
    %c0_i32_0 = arith.constant 0 : i32
    %c0_i32_1 = arith.constant 0 : i32
    return %arg0, %c0_i32, %c0_i32_0 : i32, i32, i32
  }
  func.func @transform_1(%arg0: i32, %arg1: i32) -> (i32, i32, i32) {
    %c0_i32 = arith.constant 0 : i32
    %c0_i32_0 = arith.constant 0 : i32
    %c0_i32_1 = arith.constant 0 : i32
    return %arg1, %c0_i32, %c0_i32_0 : i32, i32, i32
  }
  func.func @transform_2(%arg0: i32, %arg1: i32) -> (i32, i32, i32) {
    %c0_i32 = arith.constant 0 : i32
    %c0_i32_0 = arith.constant 0 : i32
    %c0_i32_1 = arith.constant 0 : i32
    return %arg1, %c0_i32, %c0_i32_0 : i32, i32, i32
  }
  func.func @transform_3(%arg0: i32, %arg1: i32) -> (i32, i32, i32) {
    %c0_i32 = arith.constant 0 : i32
    %c0_i32_0 = arith.constant 0 : i32
    %c0_i32_1 = arith.constant 0 : i32
    return %arg1, %c0_i32, %c0_i32_0 : i32, i32, i32
  }
  func.func @transform_4(%arg0: i32, %arg1: i32) -> (i32, i32, i32) {
    %c0_i32 = arith.constant 0 : i32
    %c0_i32_0 = arith.constant 0 : i32
    %c0_i32_1 = arith.constant 0 : i32
    return %arg1, %c0_i32, %c0_i32_0 : i32, i32, i32
  }
  func.func @transform_5(%arg0: i32, %arg1: i32) -> (i32, i32, i32) {
    %c0_i32 = arith.constant 0 : i32
    %c0_i32_0 = arith.constant 0 : i32
    %c0_i32_1 = arith.constant 0 : i32
    return %arg1, %c0_i32, %c0_i32_0 : i32, i32, i32
  }
  func.func @transform_6(%arg0: i32, %arg1: i32) -> (i32, i32, i32) {
    %c0_i32 = arith.constant 0 : i32
    %c0_i32_0 = arith.constant 0 : i32
    %c0_i32_1 = arith.constant 0 : i32
    return %arg1, %c0_i32, %c0_i32_0 : i32, i32, i32
  }
  func.func @transform_7(%arg0: i32, %arg1: i32) -> (i32, i32, i32) {
    %c0_i32 = arith.constant 0 : i32
    %c0_i32_0 = arith.constant 0 : i32
    %c0_i32_1 = arith.constant 0 : i32
    return %arg1, %c0_i32, %c0_i32_0 : i32, i32, i32
  }
  func.func @transform_8(%arg0: i32, %arg1: i32) -> (i32, i32, i32) {
    %c0_i32 = arith.constant 0 : i32
    %c0_i32_0 = arith.constant 0 : i32
    %c0_i32_1 = arith.constant 0 : i32
    return %arg1, %c0_i32, %c0_i32_0 : i32, i32, i32
  }
  func.func @transform_9(%arg0: i32, %arg1: i32) -> (i32, i32, i32) {
    %c0_i32 = arith.constant 0 : i32
    %c0_i32_0 = arith.constant 0 : i32
    %c0_i32_1 = arith.constant 0 : i32
    return %arg1, %c0_i32, %c0_i32_0 : i32, i32, i32
  }
  func.func @transform_10(%arg0: i32, %arg1: i32) -> (i32, i32, i32) {
    %c0_i32 = arith.constant 0 : i32
    %c0_i32_0 = arith.constant 0 : i32
    %c0_i32_1 = arith.constant 0 : i32
    return %arg0, %c0_i32, %c0_i32_0 : i32, i32, i32
  }
}

</mosaic_0001>

<llo_original>
// kernel: tpu_custom_call.1
$region0: #{tpu_custom_call.1}
  #allocation0 [shape = 'u32[]', space=smem, size = 0x4, offset = 0x4, fixed_abs, tag = 'smem constant byte address 0x4 - core index']
  #allocation1 [shape = 'u32[144,128]{1,0:T(1,128)}', space=vmem, size = 0x12000, scoped, tag = 'internal scratch']
  #allocation2 [shape = 'f32[1,8,128]{2,1,0:T(8,128)}', space=vmem, size = 0x1000, scoped, tag = 'scratch operand']
  %s0 = inlined_call_operand.hbm [shape: f32[2,8,128], index: 0, kind: input, shape index: {}]
  %s1 = inlined_call_operand.hbm [shape: bf16[2,128,128], index: 1, kind: input, shape index: {}]
  %s2 = inlined_call_operand.vmem [shape: f32[2,1,128], index: 2, kind: input, shape index: {}]
  %s3 = inlined_call_operand.hbm [shape: f32[2,1,128], index: 3, kind: input, shape index: {}]
  %s4 = inlined_call_operand.hbm [shape: bf16[2,128,256], index: 4, kind: input, shape index: {}]
  %s5 = inlined_call_operand.vmem [shape: f32[2,1,256], index: 5, kind: input, shape index: {}]
  %s6 = inlined_call_operand.hbm [shape: bf16[2,256,128], index: 6, kind: input, shape index: {}]
  %s7 = inlined_call_operand.vmem [shape: f32[2,1,128], index: 7, kind: input, shape index: {}]
  %s8 = inlined_call_operand.vmem [shape: f32[2,1,128], index: 8, kind: input, shape index: {}]
  %s9 = inlined_call_operand.vmem [shape: f32[2,1,128], index: 9, kind: input, shape index: {}]
  %s10 = inlined_call_operand.hbm [shape: f32[2,8,128], index: 10, kind: output, shape index: {}]
  %s11 = sld [smem:[#allocation0]]
  $region97: #{tpu_custom_call.1} parent=0
    _
  %s13 = ssub.s32 1, %s11
  %s14 = scalar_select 0, %s13, %s11
  $region1: #{tpu_custom_call.1} parent=0
    #allocation3 [shape = 'u8[8192]{0}', space=vmem, size = 0x2000, scoped, tag = 'input window, operand 0']
    #allocation4 [shape = 's32[2]{0}', space=sflag, size = 0x8, scoped, tag = 'scoped memory for tpu_custom_call.1']
    #allocation5 [shape = 's32[2]{0}', space=sflag, size = 0x8, scoped, tag = 'scoped memory for tpu_custom_call.1']
    #allocation6 [shape = 'u8[65536]{0}', space=vmem, size = 0x10000, scoped, tag = 'input window, operand 1']
    #allocation7 [shape = 's32[2]{0}', space=sflag, size = 0x8, scoped, tag = 'scoped memory for tpu_custom_call.1']
    #allocation8 [shape = 'u8[1024]{0}', space=vmem, size = 0x400, scoped, tag = 'input window, operand 3']
    #allocation9 [shape = 'u8[131072]{0}', space=vmem, size = 0x20000, scoped, tag = 'input window, operand 4']
    #allocation10 [shape = 's32[2]{0}', space=sflag, size = 0x8, scoped, tag = 'scoped memory for tpu_custom_call.1']
    #allocation11 [shape = 'u8[131072]{0}', space=vmem, size = 0x20000, scoped, tag = 'input window, operand 6']
    #allocation12 [shape = 'u8[8192]{0}', space=vmem, size = 0x2000, scoped, tag = 'output window, operand 0']
    %15 = vsyncpa [#allocation4], 0
    %s16 = scalar_lea.sflag [#allocation4], 1
    %17 = vsyncpa %s16, 0
    %18 = vsyncpa [#allocation7], 0
    %s19 = scalar_lea.sflag [#allocation7], 1
    %20 = vsyncpa %s19, 0
    %21 = vsyncpa [#allocation10], 0
    %s22 = scalar_lea.sflag [#allocation10], 1
    %23 = vsyncpa %s22, 0
    %24 = vsyncpa [#allocation5], 0
    %s25 = scalar_lea.sflag [#allocation5], 1
    %26 = vsyncpa %s25, 0
    loop: start=0, step=1, limit=6
    $region2: #{tpu_custom_call.1} parent=1 // loop_pre_header
      _
    $region3: #{tpu_custom_call.1} parent=1 // loop_header
      %s28 = sphi 0, %s32
      %p29 = scmp.ge.s32.totalorder %s28, 6
      %s35 = sphi 0, %s47
      %s36 = sphi 0, %s43
      %s37 = sphi 0, %s35
      %s38 = sphi 0, %s36
      %s39 = sphi 0, %s37
      %s40 = sphi 0, %s38
      %s50 = sphi 0, %s52
      %s53 = sphi 0, %s50
      %s54 = sphi 0, %s53
      %s70 = sphi 0, %s54
      %s76 = sphi 0, %s78
      %s79 = sphi 0, %s76
      %s80 = sphi 0, %s79
      %s96 = sphi 0, %s80
      %s102 = sphi 0, %s104
      %s105 = sphi 0, %s102
      %s106 = sphi 0, %s105
      %s122 = sphi 0, %s106
      %s128 = sphi 0, %s130
      %s131 = sphi 0, %s128
      %s132 = sphi 0, %s131
      %s148 = sphi 0, %s132
      %s154 = sphi 0, %s156
      %s157 = sphi 0, %s154
      %s158 = sphi 0, %s157
      %s174 = sphi 0, %s158
      %s180 = sphi 0, %s182
      %s183 = sphi 0, %s180
      %s184 = sphi 0, %s183
      %s200 = sphi 0, %s184
      %s206 = sphi 0, %s208
      %s209 = sphi 0, %s206
      %s210 = sphi 0, %s209
      %s226 = sphi 0, %s210
      %s232 = sphi 0, %s234
      %s235 = sphi 0, %s232
      %s236 = sphi 0, %s235
      %s252 = sphi 0, %s236
      %s258 = sphi 0, %s260
      %s261 = sphi 0, %s258
      %s262 = sphi 0, %s261
      %s278 = sphi 0, %s262
      %s284 = sphi 0, %s286
      %s287 = sphi 0, %s284
      %s288 = sphi 0, %s287
      %s304 = sphi 0, %s288
      %s310 = sphi 0, %s312
      %s313 = sphi 0, %s310
      %s314 = sphi 0, %s313
      %s330 = sphi 0, %s314
    $region4: #{tpu_custom_call.1} parent=1 // loop_header_branch
      %31 = sbr.rel (%p29) target = $region8
    $region5: #{tpu_custom_call.1} parent=1 // loop_body
      %s33 = ssub.s32 %s28, 1
      %s34 = ssub.s32 %s28, 2
      %s41 = sadd.s32 1, %s36
      %p42 = scmp.ge.s32.totalorder %s41, 2
      %s43 = scalar_select %p42, 0, %s41
      %s44 = sadd.s32 1, %s35
      %s45 = scalar_select %p42, %s44, %s35
      %p46 = scmp.ge.s32.totalorder %s45, 2
      %s47 = scalar_select %p46, 0, %s45
      %s48 = ssub.s32 %s35, %s47
      %p49 = scmp.eq.s32.totalorder %s48, 0
      %s51 = sadd.s32 %s50, 1
      %s52 = scalar_select %p49, %s50, %s51
      %p55 = pneg %p49
      %p56 = scmp.eq.s32.totalorder %s28, 3
      %p57 = por %p55, %p56
      %p58 = scmp.ne.s32.totalorder %s50, %s53
      %p59 = scmp.eq.s32.totalorder %s28, 0
      %p60 = por %p58, %p59
      %p61 = scmp.ne.s32.totalorder %s50, %s53
      %p62 = scmp.eq.s32.totalorder %s33, 3
      %p63 = por %p61, %p62
      %p64 = scmp.ne.s32.totalorder %s53, %s54
      %p65 = scmp.eq.s32.totalorder %s33, 0
      %p66 = por %p64, %p65
      %p67 = scmp.ne.s32.totalorder %s53, %s54
      %p68 = scmp.eq.s32.totalorder %s34, 3
      %p69 = por %p67, %p68
      %p71 = scmp.ne.s32.totalorder %s54, %s70
      %p72 = scmp.eq.s32.totalorder %s34, 0
      %p73 = por %p71, %p72
      %s74 = ssub.s32 %s36, %s43
      %p75 = scmp.eq.s32.totalorder %s74, 0
      %s77 = sadd.s32 %s76, 1
      %s78 = scalar_select %p75, %s76, %s77
      %p81 = pneg %p75
      %p82 = scmp.eq.s32.totalorder %s28, 3
      %p83 = por %p81, %p82
      %p84 = scmp.ne.s32.totalorder %s76, %s79
      %p85 = scmp.eq.s32.totalorder %s28, 0
      %p86 = por %p84, %p85
      %p87 = scmp.ne.s32.totalorder %s76, %s79
      %p88 = scmp.eq.s32.totalorder %s33, 3
      %p89 = por %p87, %p88
      %p90 = scmp.ne.s32.totalorder %s79, %s80
      %p91 = scmp.eq.s32.totalorder %s33, 0
      %p92 = por %p90, %p91
      %p93 = scmp.ne.s32.totalorder %s79, %s80
      %p94 = scmp.eq.s32.totalorder %s34, 3
      %p95 = por %p93, %p94
      %p97 = scmp.ne.s32.totalorder %s80, %s96
      %p98 = scmp.eq.s32.totalorder %s34, 0
      %p99 = por %p97, %p98
      %s100 = ssub.s32 %s36, %s43
      %p101 = scmp.eq.s32.totalorder %s100, 0
      %s103 = sadd.s32 %s102, 1
      %s104 = scalar_select %p101, %s102, %s103
      %p107 = pneg %p101
      %p108 = scmp.eq.s32.totalorder %s28, 3
      %p109 = por %p107, %p108
      %p110 = scmp.ne.s32.totalorder %s102, %s105
      %p111 = scmp.eq.s32.totalorder %s28, 0
      %p112 = por %p110, %p111
      %p113 = scmp.ne.s32.totalorder %s102, %s105
      %p114 = scmp.eq.s32.totalorder %s33, 3
      %p115 = por %p113, %p114
      %p116 = scmp.ne.s32.totalorder %s105, %s106
      %p117 = scmp.eq.s32.totalorder %s33, 0
      %p118 = por %p116, %p117
      %p119 = scmp.ne.s32.totalorder %s105, %s106
      %p120 = scmp.eq.s32.totalorder %s34, 3
      %p121 = por %p119, %p120
      %p123 = scmp.ne.s32.totalorder %s106, %s122
      %p124 = scmp.eq.s32.totalorder %s34, 0
      %p125 = por %p123, %p124
      %s126 = ssub.s32 %s36, %s43
      %p127 = scmp.eq.s32.totalorder %s126, 0
      %s129 = sadd.s32 %s128, 1
      %s130 = scalar_select %p127, %s128, %s129
      %p133 = pneg %p127
      %p134 = scmp.eq.s32.totalorder %s28, 3
      %p135 = por %p133, %p134
      %p136 = scmp.ne.s32.totalorder %s128, %s131
      %p137 = scmp.eq.s32.totalorder %s28, 0
      %p138 = por %p136, %p137
      %p139 = scmp.ne.s32.totalorder %s128, %s131
      %p140 = scmp.eq.s32.totalorder %s33, 3
      %p141 = por %p139, %p140
      %p142 = scmp.ne.s32.totalorder %s131, %s132
      %p143 = scmp.eq.s32.totalorder %s33, 0
      %p144 = por %p142, %p143
      %p145 = scmp.ne.s32.totalorder %s131, %s132
      %p146 = scmp.eq.s32.totalorder %s34, 3
      %p147 = por %p145, %p146
      %p149 = scmp.ne.s32.totalorder %s132, %s148
      %p150 = scmp.eq.s32.totalorder %s34, 0
      %p151 = por %p149, %p150
      %s152 = ssub.s32 %s36, %s43
      %p153 = scmp.eq.s32.totalorder %s152, 0
      %s155 = sadd.s32 %s154, 1
      %s156 = scalar_select %p153, %s154, %s155
      %p159 = pneg %p153
      %p160 = scmp.eq.s32.totalorder %s28, 3
      %p161 = por %p159, %p160
      %p162 = scmp.ne.s32.totalorder %s154, %s157
      %p163 = scmp.eq.s32.totalorder %s28, 0
      %p164 = por %p162, %p163
      %p165 = scmp.ne.s32.totalorder %s154, %s157
      %p166 = scmp.eq.s32.totalorder %s33, 3
      %p167 = por %p165, %p166
      %p168 = scmp.ne.s32.totalorder %s157, %s158
      %p169 = scmp.eq.s32.totalorder %s33, 0
      %p170 = por %p168, %p169
      %p171 = scmp.ne.s32.totalorder %s157, %s158
      %p172 = scmp.eq.s32.totalorder %s34, 3
      %p173 = por %p171, %p172
      %p175 = scmp.ne.s32.totalorder %s158, %s174
      %p176 = scmp.eq.s32.totalorder %s34, 0
      %p177 = por %p175, %p176
      %s178 = ssub.s32 %s36, %s43
      %p179 = scmp.eq.s32.totalorder %s178, 0
      %s181 = sadd.s32 %s180, 1
      %s182 = scalar_select %p179, %s180, %s181
      %p185 = pneg %p179
      %p186 = scmp.eq.s32.totalorder %s28, 3
      %p187 = por %p185, %p186
      %p188 = scmp.ne.s32.totalorder %s180, %s183
      %p189 = scmp.eq.s32.totalorder %s28, 0
      %p190 = por %p188, %p189
      %p191 = scmp.ne.s32.totalorder %s180, %s183
      %p192 = scmp.eq.s32.totalorder %s33, 3
      %p193 = por %p191, %p192
      %p194 = scmp.ne.s32.totalorder %s183, %s184
      %p195 = scmp.eq.s32.totalorder %s33, 0
      %p196 = por %p194, %p195
      %p197 = scmp.ne.s32.totalorder %s183, %s184
      %p198 = scmp.eq.s32.totalorder %s34, 3
      %p199 = por %p197, %p198
      %p201 = scmp.ne.s32.totalorder %s184, %s200
      %p202 = scmp.eq.s32.totalorder %s34, 0
      %p203 = por %p201, %p202
      %s204 = ssub.s32 %s36, %s43
      %p205 = scmp.eq.s32.totalorder %s204, 0
      %s207 = sadd.s32 %s206, 1
      %s208 = scalar_select %p205, %s206, %s207
      %p211 = pneg %p205
      %p212 = scmp.eq.s32.totalorder %s28, 3
      %p213 = por %p211, %p212
      %p214 = scmp.ne.s32.totalorder %s206, %s209
      %p215 = scmp.eq.s32.totalorder %s28, 0
      %p216 = por %p214, %p215
      %p217 = scmp.ne.s32.totalorder %s206, %s209
      %p218 = scmp.eq.s32.totalorder %s33, 3
      %p219 = por %p217, %p218
      %p220 = scmp.ne.s32.totalorder %s209, %s210
      %p221 = scmp.eq.s32.totalorder %s33, 0
      %p222 = por %p220, %p221
      %p223 = scmp.ne.s32.totalorder %s209, %s210
      %p224 = scmp.eq.s32.totalorder %s34, 3
      %p225 = por %p223, %p224
      %p227 = scmp.ne.s32.totalorder %s210, %s226
      %p228 = scmp.eq.s32.totalorder %s34, 0
      %p229 = por %p227, %p228
      %s230 = ssub.s32 %s36, %s43
      %p231 = scmp.eq.s32.totalorder %s230, 0
      %s233 = sadd.s32 %s232, 1
      %s234 = scalar_select %p231, %s232, %s233
      %p237 = pneg %p231
      %p238 = scmp.eq.s32.totalorder %s28, 3
      %p239 = por %p237, %p238
      %p240 = scmp.ne.s32.totalorder %s232, %s235
      %p241 = scmp.eq.s32.totalorder %s28, 0
      %p242 = por %p240, %p241
      %p243 = scmp.ne.s32.totalorder %s232, %s235
      %p244 = scmp.eq.s32.totalorder %s33, 3
      %p245 = por %p243, %p244
      %p246 = scmp.ne.s32.totalorder %s235, %s236
      %p247 = scmp.eq.s32.totalorder %s33, 0
      %p248 = por %p246, %p247
      %p249 = scmp.ne.s32.totalorder %s235, %s236
      %p250 = scmp.eq.s32.totalorder %s34, 3
      %p251 = por %p249, %p250
      %p253 = scmp.ne.s32.totalorder %s236, %s252
      %p254 = scmp.eq.s32.totalorder %s34, 0
      %p255 = por %p253, %p254
      %s256 = ssub.s32 %s36, %s43
      %p257 = scmp.eq.s32.totalorder %s256, 0
      %s259 = sadd.s32 %s258, 1
      %s260 = scalar_select %p257, %s258, %s259
      %p263 = pneg %p257
      %p264 = scmp.eq.s32.totalorder %s28, 3
      %p265 = por %p263, %p264
      %p266 = scmp.ne.s32.totalorder %s258, %s261
      %p267 = scmp.eq.s32.totalorder %s28, 0
      %p268 = por %p266, %p267
      %p269 = scmp.ne.s32.totalorder %s258, %s261
      %p270 = scmp.eq.s32.totalorder %s33, 3
      %p271 = por %p269, %p270
      %p272 = scmp.ne.s32.totalorder %s261, %s262
      %p273 = scmp.eq.s32.totalorder %s33, 0
      %p274 = por %p272, %p273
      %p275 = scmp.ne.s32.totalorder %s261, %s262
      %p276 = scmp.eq.s32.totalorder %s34, 3
      %p277 = por %p275, %p276
      %p279 = scmp.ne.s32.totalorder %s262, %s278
      %p280 = scmp.eq.s32.totalorder %s34, 0
      %p281 = por %p279, %p280
      %s282 = ssub.s32 %s36, %s43
      %p283 = scmp.eq.s32.totalorder %s282, 0
      %s285 = sadd.s32 %s284, 1
      %s286 = scalar_select %p283, %s284, %s285
      %p289 = pneg %p283
      %p290 = scmp.eq.s32.totalorder %s28, 3
      %p291 = por %p289, %p290
      %p292 = scmp.ne.s32.totalorder %s284, %s287
      %p293 = scmp.eq.s32.totalorder %s28, 0
      %p294 = por %p292, %p293
      %p295 = scmp.ne.s32.totalorder %s284, %s287
      %p296 = scmp.eq.s32.totalorder %s33, 3
      %p297 = por %p295, %p296
      %p298 = scmp.ne.s32.totalorder %s287, %s288
      %p299 = scmp.eq.s32.totalorder %s33, 0
      %p300 = por %p298, %p299
      %p301 = scmp.ne.s32.totalorder %s287, %s288
      %p302 = scmp.eq.s32.totalorder %s34, 3
      %p303 = por %p301, %p302
      %p305 = scmp.ne.s32.totalorder %s288, %s304
      %p306 = scmp.eq.s32.totalorder %s34, 0
      %p307 = por %p305, %p306
      %s308 = ssub.s32 %s35, %s47
      %p309 = scmp.eq.s32.totalorder %s308, 0
      %s311 = sadd.s32 %s310, 1
      %s312 = scalar_select %p309, %s310, %s311
      %p315 = pneg %p309
      %p316 = scmp.eq.s32.totalorder %s28, 3
      %p317 = por %p315, %p316
      %p318 = scmp.ne.s32.totalorder %s310, %s313
      %p319 = scmp.eq.s32.totalorder %s28, 0
      %p320 = por %p318, %p319
      %p321 = scmp.ne.s32.totalorder %s310, %s313
      %p322 = scmp.eq.s32.totalorder %s33, 3
      %p323 = por %p321, %p322
      %p324 = scmp.ne.s32.totalorder %s313, %s314
      %p325 = scmp.eq.s32.totalorder %s33, 0
      %p326 = por %p324, %p325
      %p327 = scmp.ne.s32.totalorder %s313, %s314
      %p328 = scmp.eq.s32.totalorder %s34, 3
      %p329 = por %p327, %p328
      %p331 = scmp.ne.s32.totalorder %s314, %s330
      %p332 = scmp.eq.s32.totalorder %s34, 0
      %p333 = por %p331, %p332
      %p334 = scmp.le.s32.totalorder 1, %s28
      %p335 = scmp.lt.s32.totalorder %s28, 5
      %p336 = pnand %p334, %p335
      %p337 = pneg %p336
      // Predicated region
      $region9: #{tpu_custom_call.1} parent=5 // pred_check
        _
      $region10: #{tpu_custom_call.1} parent=5 // pred_check_branch
        %339 = sbr.rel (%p336) target = $region12
      $region11: #{tpu_custom_call.1} parent=5 // pred_region
        %s340 = ssub.s32 %s28, 1
      $region12: #{tpu_custom_call.1} parent=5 // pred_fallthru
        _
      %p341 = scmp.lt.s32.totalorder %s28, 4
      // Predicated region
      $region13: #{tpu_custom_call.1} parent=5 // pred_check
        %p342 = pneg %p341
      $region14: #{tpu_custom_call.1} parent=5 // pred_check_branch
        %344 = sbr.rel (%p342) target = $region16
      $region15: #{tpu_custom_call.1} parent=5 // pred_region
        // Predicated region
        $region17: #{tpu_custom_call.1} parent=15 // pred_check
          %p345 = pneg %p60
        $region18: #{tpu_custom_call.1} parent=15 // pred_check_branch
          %347 = sbr.rel (%p345) target = $region20
        $region19: #{tpu_custom_call.1} parent=15 // pred_region
          %s348 = sand.u32 %s50, 1
          %s349 = scalar_lea.sflag [#allocation4], %s348
          %s350 = sand.u32 %s50, 1
          %s351 = smul.addr %s350, 8
          %s352 = scalar_lea.vmem [#allocation3], %s351
          %s354 = ssub.s32 128, 128
          %355 = vsyncadd %s349, %s354
          %s356 = smul.addr %s35, 128
          %s357 = scalar_lea.hbm %s0, %s356
          %s359 = sshll.u32 %s352, 4
          %s360 = int_to_ptr.vmem [resolvable:$true] %s359
          %362 = dma.hbm_to_vmem [thread:$0]  %s357, 128, %s360, %s349
        $region20: #{tpu_custom_call.1} parent=15 // pred_fallthru
          _
        // Predicated region
        $region21: #{tpu_custom_call.1} parent=15 // pred_check
          %p363 = pneg %p86
        $region22: #{tpu_custom_call.1} parent=15 // pred_check_branch
          %365 = sbr.rel (%p363) target = $region24
        $region23: #{tpu_custom_call.1} parent=15 // pred_region
          %s366 = sand.u32 %s28, 1
          %s367 = scalar_lea.sflag [#allocation7], %s366
          %s368 = sand.u32 %s76, 1
          %s369 = smul.addr %s368, 64
          %s370 = scalar_lea.vmem [#allocation6], %s369
          %s372 = ssub.s32 1024, 1024
          %373 = vsyncadd %s367, %s372
          %s374 = smul.addr %s36, 16
          %s375 = smul.addr %s374, 64
          %s376 = scalar_lea.hbm %s1, %s375
          %s377 = sshll.u32 %s370, 4
          %s378 = int_to_ptr.vmem [resolvable:$true] %s377
          %383 = dma.hbm_to_vmem [thread:$0]  %s376, 1024, %s378, %s367, 64, 64, 4
        $region24: #{tpu_custom_call.1} parent=15 // pred_fallthru
          _
        // Predicated region
        $region25: #{tpu_custom_call.1} parent=15 // pred_check
          %p384 = pneg %p112
        $region26: #{tpu_custom_call.1} parent=15 // pred_check_branch
          %386 = sbr.rel (%p384) target = $region28
        $region27: #{tpu_custom_call.1} parent=15 // pred_region
          %p387 = scmp.lt.s32.totalorder %s36, 1
          %s388 = scalar_select %p387, %s36, 1
          %s389 = scalar_lea.vmem %s2, %s388
        $region28: #{tpu_custom_call.1} parent=15 // pred_fallthru
          _
        // Predicated region
        $region29: #{tpu_custom_call.1} parent=15 // pred_check
          %p390 = pneg %p138
        $region30: #{tpu_custom_call.1} parent=15 // pred_check_branch
          %392 = sbr.rel (%p390) target = $region32
        $region31: #{tpu_custom_call.1} parent=15 // pred_region
          %s393 = sand.u32 %s28, 1
          %s394 = scalar_lea.sflag [#allocation7], %s393
          %s395 = sand.u32 %s128, 1
          %s396 = scalar_lea.vmem [#allocation8], %s395
          %s398 = ssub.s32 16, 16
          %399 = vsyncadd %s394, %s398
          %s400 = smul.addr %s36, 16
          %s401 = scalar_lea.hbm %s3, %s400
          %s403 = sshll.u32 %s396, 4
          %s404 = int_to_ptr.vmem [resolvable:$true] %s403
          %406 = dma.hbm_to_vmem [thread:$0]  %s401, 16, %s404, %s394
        $region32: #{tpu_custom_call.1} parent=15 // pred_fallthru
          _
        // Predicated region
        $region33: #{tpu_custom_call.1} parent=15 // pred_check
          %p407 = pneg %p164
        $region34: #{tpu_custom_call.1} parent=15 // pred_check_branch
          %409 = sbr.rel (%p407) target = $region36
        $region35: #{tpu_custom_call.1} parent=15 // pred_region
          %s410 = sand.u32 %s28, 1
          %s411 = scalar_lea.sflag [#allocation10], %s410
          %s412 = sand.u32 %s154, 1
          %s413 = smul.addr %s412, 128
          %s414 = scalar_lea.vmem [#allocation9], %s413
          %s416 = ssub.s32 2048, 2048
          %417 = vsyncadd %s411, %s416
          %s418 = smul.addr %s36, 32
          %s419 = smul.addr %s418, 64
          %s420 = scalar_lea.hbm %s4, %s419
          %s421 = sshll.u32 %s414, 4
          %s422 = int_to_ptr.vmem [resolvable:$true] %s421
          %427 = dma.hbm_to_vmem [thread:$0]  %s420, 2048, %s422, %s411, 128, 128, 8
        $region36: #{tpu_custom_call.1} parent=15 // pred_fallthru
          _
        // Predicated region
        $region37: #{tpu_custom_call.1} parent=15 // pred_check
          %p428 = pneg %p190
        $region38: #{tpu_custom_call.1} parent=15 // pred_check_branch
          %430 = sbr.rel (%p428) target = $region40
        $region39: #{tpu_custom_call.1} parent=15 // pred_region
          %p431 = scmp.lt.s32.totalorder %s36, 1
          %s432 = scalar_select %p431, %s36, 1
          %s433 = smul.addr %s432, 2
          %s434 = scalar_lea.vmem %s5, %s433
        $region40: #{tpu_custom_call.1} parent=15 // pred_fallthru
          _
        // Predicated region
        $region41: #{tpu_custom_call.1} parent=15 // pred_check
          %p435 = pneg %p216
        $region42: #{tpu_custom_call.1} parent=15 // pred_check_branch
          %437 = sbr.rel (%p435) target = $region44
        $region43: #{tpu_custom_call.1} parent=15 // pred_region
          %s438 = sand.u32 %s28, 1
          %s439 = scalar_lea.sflag [#allocation10], %s438
          %s440 = sand.u32 %s206, 1
          %s441 = smul.addr %s440, 128
          %s442 = scalar_lea.vmem [#allocation11], %s441
          %s444 = ssub.s32 2048, 2048
          %445 = vsyncadd %s439, %s444
          %s446 = smul.addr %s36, 32
          %s447 = smul.addr %s446, 64
          %s448 = scalar_lea.hbm %s6, %s447
          %s449 = sshll.u32 %s442, 4
          %s450 = int_to_ptr.vmem [resolvable:$true] %s449
          %455 = dma.hbm_to_vmem [thread:$0]  %s448, 2048, %s450, %s439, 64, 64, 4
        $region44: #{tpu_custom_call.1} parent=15 // pred_fallthru
          _
        // Predicated region
        $region45: #{tpu_custom_call.1} parent=15 // pred_check
          %p456 = pneg %p242
        $region46: #{tpu_custom_call.1} parent=15 // pred_check_branch
          %458 = sbr.rel (%p456) target = $region48
        $region47: #{tpu_custom_call.1} parent=15 // pred_region
          %p459 = scmp.lt.s32.totalorder %s36, 1
          %s460 = scalar_select %p459, %s36, 1
          %s461 = scalar_lea.vmem %s7, %s460
        $region48: #{tpu_custom_call.1} parent=15 // pred_fallthru
          _
        // Predicated region
        $region49: #{tpu_custom_call.1} parent=15 // pred_check
          %p462 = pneg %p268
        $region50: #{tpu_custom_call.1} parent=15 // pred_check_branch
          %464 = sbr.rel (%p462) target = $region52
        $region51: #{tpu_custom_call.1} parent=15 // pred_region
          %p465 = scmp.lt.s32.totalorder %s36, 1
          %s466 = scalar_select %p465, %s36, 1
          %s467 = scalar_lea.vmem %s8, %s466
        $region52: #{tpu_custom_call.1} parent=15 // pred_fallthru
          _
        // Predicated region
        $region53: #{tpu_custom_call.1} parent=15 // pred_check
          %p468 = pneg %p294
        $region54: #{tpu_custom_call.1} parent=15 // pred_check_branch
          %470 = sbr.rel (%p468) target = $region56
        $region55: #{tpu_custom_call.1} parent=15 // pred_region
          %p471 = scmp.lt.s32.totalorder %s36, 1
          %s472 = scalar_select %p471, %s36, 1
          %s473 = scalar_lea.vmem %s9, %s472
        $region56: #{tpu_custom_call.1} parent=15 // pred_fallthru
          _
      $region16: #{tpu_custom_call.1} parent=5 // pred_fallthru
        _
      %p474 = scmp.le.s32.totalorder 1, %s28
      %p475 = scmp.lt.s32.totalorder %s28, 5
      %p476 = pnand %p474, %p475
      %p477 = pneg %p476
      // Predicated region
      $region57: #{tpu_custom_call.1} parent=5 // pred_check
        _
      $region58: #{tpu_custom_call.1} parent=5 // pred_check_branch
        %479 = sbr.rel (%p476) target = $region60
      $region59: #{tpu_custom_call.1} parent=5 // pred_region
        %s480 = ssub.s32 %s28, 1
        %s481 = sand.u32 %s53, 1
        %s482 = scalar_lea.sflag [#allocation4], %s481
        %s483 = sand.u32 %s53, 1
        %s484 = smul.addr %s483, 8
        %s485 = scalar_lea.vmem [#allocation3], %s484
        // Predicated region
        $region61: #{tpu_custom_call.1} parent=59 // pred_check
          %p486 = pneg %p66
        $region62: #{tpu_custom_call.1} parent=59 // pred_check_branch
          %488 = sbr.rel (%p486) target = $region64
        $region63: #{tpu_custom_call.1} parent=59 // pred_region
          %489 = dma.done %s482, 128
        $region64: #{tpu_custom_call.1} parent=59 // pred_fallthru
          _
        %s490 = sand.u32 %s33, 1
        %s491 = scalar_lea.sflag [#allocation7], %s490
        %s492 = sand.u32 %s79, 1
        %s493 = smul.addr %s492, 64
        %s494 = scalar_lea.vmem [#allocation6], %s493
        // Predicated region
        $region65: #{tpu_custom_call.1} parent=59 // pred_check
          %p495 = pneg %p92
        $region66: #{tpu_custom_call.1} parent=59 // pred_check_branch
          %497 = sbr.rel (%p495) target = $region68
        $region67: #{tpu_custom_call.1} parent=59 // pred_region
          %498 = dma.done %s491, 1024
        $region68: #{tpu_custom_call.1} parent=59 // pred_fallthru
          _
        %s499 = sand.u32 %s33, 1
        %s500 = scalar_lea.sflag [#allocation7], %s499
        %s501 = sand.u32 %s131, 1
        %s502 = scalar_lea.vmem [#allocation8], %s501
        // Predicated region
        $region69: #{tpu_custom_call.1} parent=59 // pred_check
          %p503 = pneg %p144
        $region70: #{tpu_custom_call.1} parent=59 // pred_check_branch
          %505 = sbr.rel (%p503) target = $region72
        $region71: #{tpu_custom_call.1} parent=59 // pred_region
          %506 = dma.done %s500, 16
        $region72: #{tpu_custom_call.1} parent=59 // pred_fallthru
          _
        %s507 = sand.u32 %s33, 1
        %s508 = scalar_lea.sflag [#allocation10], %s507
        %s509 = sand.u32 %s157, 1
        %s510 = smul.addr %s509, 128
        %s511 = scalar_lea.vmem [#allocation9], %s510
        // Predicated region
        $region73: #{tpu_custom_call.1} parent=59 // pred_check
          %p512 = pneg %p170
        $region74: #{tpu_custom_call.1} parent=59 // pred_check_branch
          %514 = sbr.rel (%p512) target = $region76
        $region75: #{tpu_custom_call.1} parent=59 // pred_region
          %515 = dma.done %s508, 2048
        $region76: #{tpu_custom_call.1} parent=59 // pred_fallthru
          _
        %s516 = sand.u32 %s33, 1
        %s517 = scalar_lea.sflag [#allocation10], %s516
        %s518 = sand.u32 %s209, 1
        %s519 = smul.addr %s518, 128
        %s520 = scalar_lea.vmem [#allocation11], %s519
        // Predicated region
        $region77: #{tpu_custom_call.1} parent=59 // pred_check
          %p521 = pneg %p222
        $region78: #{tpu_custom_call.1} parent=59 // pred_check_branch
          %523 = sbr.rel (%p521) target = $region80
        $region79: #{tpu_custom_call.1} parent=59 // pred_region
          %524 = dma.done %s517, 2048
        $region80: #{tpu_custom_call.1} parent=59 // pred_fallthru
          _
        %s525 = sand.u32 %s53, 1
        %s526 = scalar_lea.sflag [#allocation4], %s525
        %s527 = sand.u32 %s53, 1
        %s528 = smul.addr %s527, 8
        %s529 = scalar_lea.vmem [#allocation3], %s528
        %p530 = pneg %p66
        %p531 = pneg %p63
        %s532 = sand.u32 %s33, 1
        %s533 = scalar_lea.sflag [#allocation7], %s532
        %s534 = sand.u32 %s79, 1
        %s535 = smul.addr %s534, 64
        %s536 = scalar_lea.vmem [#allocation6], %s535
        %p537 = pneg %p92
        %p538 = pneg %p89
        %p539 = scmp.lt.s32.totalorder %s38, 1
        %s540 = scalar_select %p539, %s38, 1
        %s541 = scalar_lea.vmem %s2, %s540
        %p542 = pneg %p118
        %p543 = pneg %p115
        %s544 = sand.u32 %s33, 1
        %s545 = scalar_lea.sflag [#allocation7], %s544
        %s546 = sand.u32 %s131, 1
        %s547 = scalar_lea.vmem [#allocation8], %s546
        %p548 = pneg %p144
        %p549 = pneg %p141
        %s550 = sand.u32 %s33, 1
        %s551 = scalar_lea.sflag [#allocation10], %s550
        %s552 = sand.u32 %s157, 1
        %s553 = smul.addr %s552, 128
        %s554 = scalar_lea.vmem [#allocation9], %s553
        %p555 = pneg %p170
        %p556 = pneg %p167
        %p557 = scmp.lt.s32.totalorder %s38, 1
        %s558 = scalar_select %p557, %s38, 1
        %s559 = smul.addr %s558, 2
        %s560 = scalar_lea.vmem %s5, %s559
        %p561 = pneg %p196
        %p562 = pneg %p193
        %s563 = sand.u32 %s33, 1
        %s564 = scalar_lea.sflag [#allocation10], %s563
        %s565 = sand.u32 %s209, 1
        %s566 = smul.addr %s565, 128
        %s567 = scalar_lea.vmem [#allocation11], %s566
        %p568 = pneg %p222
        %p569 = pneg %p219
        %p570 = scmp.lt.s32.totalorder %s38, 1
        %s571 = scalar_select %p570, %s38, 1
        %s572 = scalar_lea.vmem %s7, %s571
        %p573 = pneg %p248
        %p574 = pneg %p245
        %p575 = scmp.lt.s32.totalorder %s38, 1
        %s576 = scalar_select %p575, %s38, 1
        %s577 = scalar_lea.vmem %s8, %s576
        %p578 = pneg %p274
        %p579 = pneg %p271
        %p580 = scmp.lt.s32.totalorder %s38, 1
        %s581 = scalar_select %p580, %s38, 1
        %s582 = scalar_lea.vmem %s9, %s581
        %p583 = pneg %p300
        %p584 = pneg %p297
        %p585 = pneg %p326
        %p586 = pneg %p323
        %s587 = sand.u32 %s313, 1
        %s588 = scalar_lea.sflag [#allocation5], %s587
        %s589 = sand.u32 %s313, 1
        %s590 = smul.addr %s589, 8
        %s591 = scalar_lea.vmem [#allocation12], %s590
        %p592 = scmp.lt.s32.totalorder %s38, 1
        %s593 = scalar_select %p592, %s38, 1
        %s594 = scalar_lea.vmem %s2, %s593
        %p595 = scmp.lt.s32.totalorder %s38, 1
        %s596 = scalar_select %p595, %s38, 1
        %s597 = smul.addr %s596, 2
        %s598 = scalar_lea.vmem %s5, %s597
        %p599 = scmp.lt.s32.totalorder %s38, 1
        %s600 = scalar_select %p599, %s38, 1
        %s601 = scalar_lea.vmem %s7, %s600
        %p602 = scmp.lt.s32.totalorder %s38, 1
        %s603 = scalar_select %p602, %s38, 1
        %s604 = scalar_lea.vmem %s8, %s603
        %p605 = scmp.lt.s32.totalorder %s38, 1
        %s606 = scalar_select %p605, %s38, 1
        %s607 = scalar_lea.vmem %s9, %s606
        %p609 = scmp.eq.s32.totalorder %s38, 0
        // Predicated region
        $region81: #{tpu_custom_call.1} parent=59 // pred_check
          %p610 = pneg %p609
        $region82: #{tpu_custom_call.1} parent=59 // pred_check_branch
          %612 = sbr.rel (%p610) target = $region84
        $region83: #{tpu_custom_call.1} parent=59 // pred_region
          %v613 = vld [vmem:[%s485] sm:$0xff]
          %614 = vst [vmem:[%s591] sm:$0xff] %v613
        $region84: #{tpu_custom_call.1} parent=59 // pred_fallthru
          _
        %v615 = vld [vmem:[%s591] sm:$0xff]
        %v616 = vmul.f32 %v615, 11.313708
        %v617 = vpack.c.bf16 %v616, %v616
        %v618 = vpack.c.bf16 %v615, %v615
        %v619 = vld [vmem:[%s494] sm:$0xf]
        %v620 = vld [vmem:[%s494 + $0x4] sm:$0xf]
        %v621 = vld [vmem:[%s494 + $0x8] sm:$0xf]
        %v622 = vld [vmem:[%s494 + $0xc] sm:$0xf]
        %v623 = vld [vmem:[%s494 + $0x10] sm:$0xf]
        %v624 = vld [vmem:[%s494 + $0x14] sm:$0xf]
        %v625 = vld [vmem:[%s494 + $0x18] sm:$0xf]
        %v626 = vld [vmem:[%s494 + $0x1c] sm:$0xf]
        %v627 = vld [vmem:[%s494 + $0x20] sm:$0xf]
        %v628 = vld [vmem:[%s494 + $0x24] sm:$0xf]
        %v629 = vld [vmem:[%s494 + $0x28] sm:$0xf]
        %v630 = vld [vmem:[%s494 + $0x2c] sm:$0xf]
        %v631 = vld [vmem:[%s494 + $0x30] sm:$0xf]
        %v632 = vld [vmem:[%s494 + $0x34] sm:$0xf]
        %v633 = vld [vmem:[%s494 + $0x38] sm:$0xf]
        %v634 = vld [vmem:[%s494 + $0x3c] sm:$0xf]
        %v635 = vld [vmem:[%s511] sm:$0xff]
        %v636 = vld [vmem:[%s511 + $0x8] sm:$0xff]
        %v637 = vld [vmem:[%s511 + $0x10] sm:$0xff]
        %v638 = vld [vmem:[%s511 + $0x18] sm:$0xff]
        %v639 = vld [vmem:[%s511 + $0x20] sm:$0xff]
        %v640 = vld [vmem:[%s511 + $0x28] sm:$0xff]
        %v641 = vld [vmem:[%s511 + $0x30] sm:$0xff]
        %v642 = vld [vmem:[%s511 + $0x38] sm:$0xff]
        %v643 = vld [vmem:[%s511 + $0x40] sm:$0xff]
        %v644 = vld [vmem:[%s511 + $0x48] sm:$0xff]
        %v645 = vld [vmem:[%s511 + $0x50] sm:$0xff]
        %v646 = vld [vmem:[%s511 + $0x58] sm:$0xff]
        %v647 = vld [vmem:[%s511 + $0x60] sm:$0xff]
        %v648 = vld [vmem:[%s511 + $0x68] sm:$0xff]
        %v649 = vld [vmem:[%s511 + $0x70] sm:$0xff]
        %v650 = vld [vmem:[%s511 + $0x78] sm:$0xff]
        %v651 = vld [vmem:[%s520] sm:$0xf]
        %v652 = vld [vmem:[%s520 + $0x4] sm:$0xf]
        %v653 = vld [vmem:[%s520 + $0x8] sm:$0xf]
        %v654 = vld [vmem:[%s520 + $0xc] sm:$0xf]
        %v655 = vld [vmem:[%s520 + $0x10] sm:$0xf]
        %v656 = vld [vmem:[%s520 + $0x14] sm:$0xf]
        %v657 = vld [vmem:[%s520 + $0x18] sm:$0xf]
        %v658 = vld [vmem:[%s520 + $0x1c] sm:$0xf]
        %v659 = vld [vmem:[%s520 + $0x20] sm:$0xf]
        %v660 = vld [vmem:[%s520 + $0x24] sm:$0xf]
        %v661 = vld [vmem:[%s520 + $0x28] sm:$0xf]
        %v662 = vld [vmem:[%s520 + $0x2c] sm:$0xf]
        %v663 = vld [vmem:[%s520 + $0x30] sm:$0xf]
        %v664 = vld [vmem:[%s520 + $0x34] sm:$0xf]
        %v665 = vld [vmem:[%s520 + $0x38] sm:$0xf]
        %v666 = vld [vmem:[%s520 + $0x3c] sm:$0xf]
        %v667 = vld [vmem:[%s520 + $0x40] sm:$0xf]
        %v668 = vld [vmem:[%s520 + $0x44] sm:$0xf]
        %v669 = vld [vmem:[%s520 + $0x48] sm:$0xf]
        %v670 = vld [vmem:[%s520 + $0x4c] sm:$0xf]
        %v671 = vld [vmem:[%s520 + $0x50] sm:$0xf]
        %v672 = vld [vmem:[%s520 + $0x54] sm:$0xf]
        %v673 = vld [vmem:[%s520 + $0x58] sm:$0xf]
        %v674 = vld [vmem:[%s520 + $0x5c] sm:$0xf]
        %v675 = vld [vmem:[%s520 + $0x60] sm:$0xf]
        %v676 = vld [vmem:[%s520 + $0x64] sm:$0xf]
        %v677 = vld [vmem:[%s520 + $0x68] sm:$0xf]
        %v678 = vld [vmem:[%s520 + $0x6c] sm:$0xf]
        %v679 = vld [vmem:[%s520 + $0x70] sm:$0xf]
        %v680 = vld [vmem:[%s520 + $0x74] sm:$0xf]
        %v681 = vld [vmem:[%s520 + $0x78] sm:$0xf]
        %v682 = vld [vmem:[%s520 + $0x7c] sm:$0xf]
        %vm683 = vcmask 261120
        %v685 = vsel %vm683, %v617, 0
        %v688 = vsel %vm683, %v618, 0
        %690 = vmatprep.subr.bf16.mxu0 0
        %691 = vmatpush1.bf16.xpose.msra.mxu0 0
        %692 = vmatprep.subr.bf16.mxu0 0
        %693 = vmatpush1.bf16.xpose.msra.mxu0 0
        %694 = vmatprep.subr.bf16.mxu0 0
        %695 = vmatpush1.bf16.xpose.msra.mxu0 0
        %696 = vmatprep.subr.bf16.mxu0 0
        %697 = vmatpush1.bf16.xpose.msra.mxu0 0
        %698 = vmatprep.subr.bf16.mxu0 0
        %699 = vmatpush1.bf16.xpose.msra.mxu0 0
        %700 = vmatprep.subr.bf16.mxu0 0
        %701 = vmatpush1.bf16.xpose.msra.mxu0 0
        %702 = vmatprep.subr.bf16.mxu0 0
        %703 = vmatpush1.bf16.xpose.msra.mxu0 0
        %704 = vmatprep.subr.bf16.mxu0 0
        %705 = vmatpush1.bf16.xpose.msra.mxu0 %v688
        %706 = vmatprep.subr.bf16.mxu0 0
        %707 = vmatpush2.bf16.xpose.msra.mxu0 0
        %708 = vmatprep.subr.bf16.mxu0 0
        %709 = vmatpush2.bf16.xpose.msra.mxu0 0
        %710 = vmatprep.subr.bf16.mxu0 0
        %711 = vmatpush2.bf16.xpose.msra.mxu0 0
        %712 = vmatprep.subr.bf16.mxu0 0
        %713 = vmatpush2.bf16.xpose.msra.mxu0 0
        %714 = vmatprep.subr.bf16.mxu0 0
        %715 = vmatpush2.bf16.xpose.msra.mxu0 0
        %716 = vmatprep.subr.bf16.mxu0 0
        %717 = vmatpush2.bf16.xpose.msra.mxu0 0
        %718 = vmatprep.subr.bf16.mxu0 0
        %719 = vmatpush2.bf16.xpose.msra.mxu0 0
        %720 = vmatprep.subr.bf16.mxu0 0
        %721 = vmatpush2.bf16.xpose.msra.mxu0 0
        %722 = vmatprep.mubr.bf16.mxu0 0
        %723 = vmatmul.mubr.bf16.gmra.mxu0 %v685
        %v724 = vpop.f32.mrf.mxu0
        %v725 = vadd.f32 0.0, %v724
        %v726 = vpop.f32.mrf.mxu0
        %v727 = vpop.f32.mrf.mxu0
        %v728 = vpop.f32.mrf.mxu0
        %729 = vdwg.mxu0
        %vm730 = vcmask 64512
        %v731 = vsel %vm730, %v725, -inf
        %732 = vmax.xlane.f32.xlu0 %v731
        %v733 = vpop.xlane.xlu0 %732
        %v734 = vsub.f32 %v725, %v733
        %v735 = vmul.f32 %v734, 1.442695
        %v736 = vpow.pop %v735
        %v737 = vsel %vm730, %v736, 0.0
        %738 = vadd.xlane.f32.xlu0 %v737
        %v739 = vpop.xlane.xlu0 %738
        %v740 = vrcp.pop %v739
        %v741 = vmul.f32 %v736, %v740
        %v742 = vpack.c.bf16 %v741, %v741
        %v744 = vsel %vm730, %v742, 0
        %vm746 = vcmask 1043456
        %v747 = vsel %vm746, %v618, 0
        %749 = vmatprep.subr.bf16.mxu0 0
        %750 = vmatpush1.bf16.msra.mxu0 0
        %751 = vmatprep.subr.bf16.mxu0 0
        %752 = vmatpush1.bf16.msra.mxu0 0
        %753 = vmatprep.subr.bf16.mxu0 0
        %754 = vmatpush1.bf16.msra.mxu0 0
        %755 = vmatprep.subr.bf16.mxu0 0
        %756 = vmatpush1.bf16.msra.mxu0 0
        %757 = vmatprep.subr.bf16.mxu0 0
        %758 = vmatpush1.bf16.msra.mxu0 0
        %759 = vmatprep.subr.bf16.mxu0 0
        %760 = vmatpush1.bf16.msra.mxu0 0
        %761 = vmatprep.subr.bf16.mxu0 0
        %762 = vmatpush1.bf16.msra.mxu0 0
        %763 = vmatprep.subr.bf16.mxu0 0
        %764 = vmatpush1.bf16.msra.mxu0 %v747
        %765 = vmatprep.subr.bf16.mxu0 0
        %766 = vmatpush2.bf16.msra.mxu0 0
        %767 = vmatprep.subr.bf16.mxu0 0
        %768 = vmatpush2.bf16.msra.mxu0 0
        %769 = vmatprep.subr.bf16.mxu0 0
        %770 = vmatpush2.bf16.msra.mxu0 0
        %771 = vmatprep.subr.bf16.mxu0 0
        %772 = vmatpush2.bf16.msra.mxu0 0
        %773 = vmatprep.subr.bf16.mxu0 0
        %774 = vmatpush2.bf16.msra.mxu0 0
        %775 = vmatprep.subr.bf16.mxu0 0
        %776 = vmatpush2.bf16.msra.mxu0 0
        %777 = vmatprep.subr.bf16.mxu0 0
        %778 = vmatpush2.bf16.msra.mxu0 0
        %779 = vmatprep.subr.bf16.mxu0 0
        %780 = vmatpush2.bf16.msra.mxu0 0
        %781 = vmatprep.mubr.bf16.mxu0 0
        %782 = vmatmul.mubr.bf16.gmra.mxu0 %v744
        %v783 = vpop.f32.mrf.mxu0
        %v784 = vadd.f32 0.0, %v783
        %v785 = vpop.f32.mrf.mxu0
        %v786 = vpop.f32.mrf.mxu0
        %v787 = vpop.f32.mrf.mxu0
        %788 = vdwg.mxu0
        %789 = vst.msk [vmem:[#allocation2] sm:$0xff] %vm683, %v784
        %791 = vrot.lane.b32.xlu0 %v617, 96
        %v792 = vpop.permute.xlu0 %791
        %794 = vrot.lane.b32.xlu0 %v618, 96
        %v795 = vpop.permute.xlu0 %794
        %v797 = vsel %vm683, %v792, 0
        %v800 = vsel %vm683, %v795, 0
        %802 = vmatprep.subr.bf16.mxu0 0
        %803 = vmatpush1.bf16.xpose.msra.mxu0 0
        %804 = vmatprep.subr.bf16.mxu0 0
        %805 = vmatpush1.bf16.xpose.msra.mxu0 0
        %806 = vmatprep.subr.bf16.mxu0 0
        %807 = vmatpush1.bf16.xpose.msra.mxu0 0
        %808 = vmatprep.subr.bf16.mxu0 0
        %809 = vmatpush1.bf16.xpose.msra.mxu0 0
        %810 = vmatprep.subr.bf16.mxu0 0
        %811 = vmatpush1.bf16.xpose.msra.mxu0 0
        %812 = vmatprep.subr.bf16.mxu0 0
        %813 = vmatpush1.bf16.xpose.msra.mxu0 0
        %814 = vmatprep.subr.bf16.mxu0 0
        %815 = vmatpush1.bf16.xpose.msra.mxu0 0
        %816 = vmatprep.subr.bf16.mxu0 0
        %817 = vmatpush1.bf16.xpose.msra.mxu0 %v800
        %818 = vmatprep.subr.bf16.mxu0 0
        %819 = vmatpush2.bf16.xpose.msra.mxu0 0
        %820 = vmatprep.subr.bf16.mxu0 0
        %821 = vmatpush2.bf16.xpose.msra.mxu0 0
        %822 = vmatprep.subr.bf16.mxu0 0
        %823 = vmatpush2.bf16.xpose.msra.mxu0 0
        %824 = vmatprep.subr.bf16.mxu0 0
        %825 = vmatpush2.bf16.xpose.msra.mxu0 0
        %826 = vmatprep.subr.bf16.mxu0 0
        %827 = vmatpush2.bf16.xpose.msra.mxu0 0
        %828 = vmatprep.subr.bf16.mxu0 0
        %829 = vmatpush2.bf16.xpose.msra.mxu0 0
        %830 = vmatprep.subr.bf16.mxu0 0
        %831 = vmatpush2.bf16.xpose.msra.mxu0 0
        %832 = vmatprep.subr.bf16.mxu0 0
        %833 = vmatpush2.bf16.xpose.msra.mxu0 0
        %834 = vmatprep.mubr.bf16.mxu0 0
        %835 = vmatmul.mubr.bf16.gmra.mxu0 %v797
        %v836 = vpop.f32.mrf.mxu0
        %v837 = vadd.f32 0.0, %v836
        %v838 = vpop.f32.mrf.mxu0
        %v839 = vpop.f32.mrf.mxu0
        %v840 = vpop.f32.mrf.mxu0
        %841 = vdwg.mxu0
        %v842 = vsel %vm730, %v837, -inf
        %843 = vmax.xlane.f32.xlu0 %v842
        %v844 = vpop.xlane.xlu0 %843
        %v845 = vsub.f32 %v837, %v844
        %v846 = vmul.f32 %v845, 1.442695
        %v847 = vpow.pop %v846
        %v848 = vsel %vm730, %v847, 0.0
        %849 = vadd.xlane.f32.xlu0 %v848
        %v850 = vpop.xlane.xlu0 %849
        %v851 = vrcp.pop %v850
        %v852 = vmul.f32 %v847, %v851
        %v853 = vpack.c.bf16 %v852, %v852
        %v855 = vsel %vm730, %v853, 0
        %v857 = vsel %vm746, %v795, 0
        %859 = vmatprep.subr.bf16.mxu0 0
        %860 = vmatpush1.bf16.msra.mxu0 0
        %861 = vmatprep.subr.bf16.mxu0 0
        %862 = vmatpush1.bf16.msra.mxu0 0
        %863 = vmatprep.subr.bf16.mxu0 0
        %864 = vmatpush1.bf16.msra.mxu0 0
        %865 = vmatprep.subr.bf16.mxu0 0
        %866 = vmatpush1.bf16.msra.mxu0 0
        %867 = vmatprep.subr.bf16.mxu0 0
        %868 = vmatpush1.bf16.msra.mxu0 0
        %869 = vmatprep.subr.bf16.mxu0 0
        %870 = vmatpush1.bf16.msra.mxu0 0
        %871 = vmatprep.subr.bf16.mxu0 0
        %872 = vmatpush1.bf16.msra.mxu0 0
        %873 = vmatprep.subr.bf16.mxu0 0
        %874 = vmatpush1.bf16.msra.mxu0 %v857
        %875 = vmatprep.subr.bf16.mxu0 0
        %876 = vmatpush2.bf16.msra.mxu0 0
        %877 = vmatprep.subr.bf16.mxu0 0
        %878 = vmatpush2.bf16.msra.mxu0 0
        %879 = vmatprep.subr.bf16.mxu0 0
        %880 = vmatpush2.bf16.msra.mxu0 0
        %881 = vmatprep.subr.bf16.mxu0 0
        %882 = vmatpush2.bf16.msra.mxu0 0
        %883 = vmatprep.subr.bf16.mxu0 0
        %884 = vmatpush2.bf16.msra.mxu0 0
        %885 = vmatprep.subr.bf16.mxu0 0
        %886 = vmatpush2.bf16.msra.mxu0 0
        %887 = vmatprep.subr.bf16.mxu0 0
        %888 = vmatpush2.bf16.msra.mxu0 0
        %889 = vmatprep.subr.bf16.mxu0 0
        %890 = vmatpush2.bf16.msra.mxu0 0
        %891 = vmatprep.mubr.bf16.mxu0 0
        %892 = vmatmul.mubr.bf16.gmra.mxu0 %v855
        %v893 = vpop.f32.mrf.mxu0
        %v894 = vadd.f32 0.0, %v893
        %v895 = vpop.f32.mrf.mxu0
        %v896 = vpop.f32.mrf.mxu0
        %v897 = vpop.f32.mrf.mxu0
        %898 = vdwg.mxu0
        %900 = vrot.lane.b32.xlu0 %v894, 32
        %v901 = vpop.permute.xlu0 %900
        %vm903 = vcmask 523520
        %904 = vst.msk [vmem:[#allocation2] sm:$0xff] %vm903, %v901
        %905 = vrot.lane.b32.xlu0 %v617, 64
        %v906 = vpop.permute.xlu0 %905
        %907 = vrot.lane.b32.xlu0 %v618, 64
        %v908 = vpop.permute.xlu0 %907
        %v910 = vsel %vm683, %v906, 0
        %v913 = vsel %vm683, %v908, 0
        %915 = vmatprep.subr.bf16.mxu0 0
        %916 = vmatpush1.bf16.xpose.msra.mxu0 0
        %917 = vmatprep.subr.bf16.mxu0 0
        %918 = vmatpush1.bf16.xpose.msra.mxu0 0
        %919 = vmatprep.subr.bf16.mxu0 0
        %920 = vmatpush1.bf16.xpose.msra.mxu0 0
        %921 = vmatprep.subr.bf16.mxu0 0
        %922 = vmatpush1.bf16.xpose.msra.mxu0 0
        %923 = vmatprep.subr.bf16.mxu0 0
        %924 = vmatpush1.bf16.xpose.msra.mxu0 0
        %925 = vmatprep.subr.bf16.mxu0 0
        %926 = vmatpush1.bf16.xpose.msra.mxu0 0
        %927 = vmatprep.subr.bf16.mxu0 0
        %928 = vmatpush1.bf16.xpose.msra.mxu0 0
        %929 = vmatprep.subr.bf16.mxu0 0
        %930 = vmatpush1.bf16.xpose.msra.mxu0 %v913
        %931 = vmatprep.subr.bf16.mxu0 0
        %932 = vmatpush2.bf16.xpose.msra.mxu0 0
        %933 = vmatprep.subr.bf16.mxu0 0
        %934 = vmatpush2.bf16.xpose.msra.mxu0 0
        %935 = vmatprep.subr.bf16.mxu0 0
        %936 = vmatpush2.bf16.xpose.msra.mxu0 0
        %937 = vmatprep.subr.bf16.mxu0 0
        %938 = vmatpush2.bf16.xpose.msra.mxu0 0
        %939 = vmatprep.subr.bf16.mxu0 0
        %940 = vmatpush2.bf16.xpose.msra.mxu0 0
        %941 = vmatprep.subr.bf16.mxu0 0
        %942 = vmatpush2.bf16.xpose.msra.mxu0 0
        %943 = vmatprep.subr.bf16.mxu0 0
        %944 = vmatpush2.bf16.xpose.msra.mxu0 0
        %945 = vmatprep.subr.bf16.mxu0 0
        %946 = vmatpush2.bf16.xpose.msra.mxu0 0
        %947 = vmatprep.mubr.bf16.mxu0 0
        %948 = vmatmul.mubr.bf16.gmra.mxu0 %v910
        %v949 = vpop.f32.mrf.mxu0
        %v950 = vadd.f32 0.0, %v949
        %v951 = vpop.f32.mrf.mxu0
        %v952 = vpop.f32.mrf.mxu0
        %v953 = vpop.f32.mrf.mxu0
        %954 = vdwg.mxu0
        %v955 = vsel %vm730, %v950, -inf
        %956 = vmax.xlane.f32.xlu0 %v955
        %v957 = vpop.xlane.xlu0 %956
        %v958 = vsub.f32 %v950, %v957
        %v959 = vmul.f32 %v958, 1.442695
        %v960 = vpow.pop %v959
        %v961 = vsel %vm730, %v960, 0.0
        %962 = vadd.xlane.f32.xlu0 %v961
        %v963 = vpop.xlane.xlu0 %962
        %v964 = vrcp.pop %v963
        %v965 = vmul.f32 %v960, %v964
        %v966 = vpack.c.bf16 %v965, %v965
        %v968 = vsel %vm730, %v966, 0
        %v970 = vsel %vm746, %v908, 0
        %972 = vmatprep.subr.bf16.mxu0 0
        %973 = vmatpush1.bf16.msra.mxu0 0
        %974 = vmatprep.subr.bf16.mxu0 0
        %975 = vmatpush1.bf16.msra.mxu0 0
        %976 = vmatprep.subr.bf16.mxu0 0
        %977 = vmatpush1.bf16.msra.mxu0 0
        %978 = vmatprep.subr.bf16.mxu0 0
        %979 = vmatpush1.bf16.msra.mxu0 0
        %980 = vmatprep.subr.bf16.mxu0 0
        %981 = vmatpush1.bf16.msra.mxu0 0
        %982 = vmatprep.subr.bf16.mxu0 0
        %983 = vmatpush1.bf16.msra.mxu0 0
        %984 = vmatprep.subr.bf16.mxu0 0
        %985 = vmatpush1.bf16.msra.mxu0 0
        %986 = vmatprep.subr.bf16.mxu0 0
        %987 = vmatpush1.bf16.msra.mxu0 %v970
        %988 = vmatprep.subr.bf16.mxu0 0
        %989 = vmatpush2.bf16.msra.mxu0 0
        %990 = vmatprep.subr.bf16.mxu0 0
        %991 = vmatpush2.bf16.msra.mxu0 0
        %992 = vmatprep.subr.bf16.mxu0 0
        %993 = vmatpush2.bf16.msra.mxu0 0
        %994 = vmatprep.subr.bf16.mxu0 0
        %995 = vmatpush2.bf16.msra.mxu0 0
        %996 = vmatprep.subr.bf16.mxu0 0
        %997 = vmatpush2.bf16.msra.mxu0 0
        %998 = vmatprep.subr.bf16.mxu0 0
        %999 = vmatpush2.bf16.msra.mxu0 0
        %1000 = vmatprep.subr.bf16.mxu0 0
        %1001 = vmatpush2.bf16.msra.mxu0 0
        %1002 = vmatprep.subr.bf16.mxu0 0
        %1003 = vmatpush2.bf16.msra.mxu0 0
        %1004 = vmatprep.mubr.bf16.mxu0 0
        %1005 = vmatmul.mubr.bf16.gmra.mxu0 %v968
        %v1006 = vpop.f32.mrf.mxu0
        %v1007 = vadd.f32 0.0, %v1006
        %v1008 = vpop.f32.mrf.mxu0
        %v1009 = vpop.f32.mrf.mxu0
        %v1010 = vpop.f32.mrf.mxu0
        %1011 = vdwg.mxu0
        %1013 = vrot.lane.b32.xlu0 %v1007, 64
        %v1014 = vpop.permute.xlu0 %1013
        %vm1016 = vcmask 785920
        %1017 = vst.msk [vmem:[#allocation2] sm:$0xff] %vm1016, %v1014
        %1018 = vrot.lane.b32.xlu0 %v617, 32
        %v1019 = vpop.permute.xlu0 %1018
        %1020 = vrot.lane.b32.xlu0 %v618, 32
        %v1021 = vpop.permute.xlu0 %1020
        %v1023 = vsel %vm683, %v1019, 0
        %v1026 = vsel %vm683, %v1021, 0
        %1028 = vmatprep.subr.bf16.mxu0 0
        %1029 = vmatpush1.bf16.xpose.msra.mxu0 0
        %1030 = vmatprep.subr.bf16.mxu0 0
        %1031 = vmatpush1.bf16.xpose.msra.mxu0 0
        %1032 = vmatprep.subr.bf16.mxu0 0
        %1033 = vmatpush1.bf16.xpose.msra.mxu0 0
        %1034 = vmatprep.subr.bf16.mxu0 0
        %1035 = vmatpush1.bf16.xpose.msra.mxu0 0
        %1036 = vmatprep.subr.bf16.mxu0 0
        %1037 = vmatpush1.bf16.xpose.msra.mxu0 0
        %1038 = vmatprep.subr.bf16.mxu0 0
        %1039 = vmatpush1.bf16.xpose.msra.mxu0 0
        %1040 = vmatprep.subr.bf16.mxu0 0
        %1041 = vmatpush1.bf16.xpose.msra.mxu0 0
        %1042 = vmatprep.subr.bf16.mxu0 0
        %1043 = vmatpush1.bf16.xpose.msra.mxu0 %v1026
        %1044 = vmatprep.subr.bf16.mxu0 0
        %1045 = vmatpush2.bf16.xpose.msra.mxu0 0
        %1046 = vmatprep.subr.bf16.mxu0 0
        %1047 = vmatpush2.bf16.xpose.msra.mxu0 0
        %1048 = vmatprep.subr.bf16.mxu0 0
        %1049 = vmatpush2.bf16.xpose.msra.mxu0 0
        %1050 = vmatprep.subr.bf16.mxu0 0
        %1051 = vmatpush2.bf16.xpose.msra.mxu0 0
        %1052 = vmatprep.subr.bf16.mxu0 0
        %1053 = vmatpush2.bf16.xpose.msra.mxu0 0
        %1054 = vmatprep.subr.bf16.mxu0 0
        %1055 = vmatpush2.bf16.xpose.msra.mxu0 0
        %1056 = vmatprep.subr.bf16.mxu0 0
        %1057 = vmatpush2.bf16.xpose.msra.mxu0 0
        %1058 = vmatprep.subr.bf16.mxu0 0
        %1059 = vmatpush2.bf16.xpose.msra.mxu0 0
        %1060 = vmatprep.mubr.bf16.mxu0 0
        %1061 = vmatmul.mubr.bf16.gmra.mxu0 %v1023
        %v1062 = vpop.f32.mrf.mxu0
        %v1063 = vadd.f32 0.0, %v1062
        %v1064 = vpop.f32.mrf.mxu0
        %v1065 = vpop.f32.mrf.mxu0
        %v1066 = vpop.f32.mrf.mxu0
        %1067 = vdwg.mxu0
        %v1068 = vsel %vm730, %v1063, -inf
        %1069 = vmax.xlane.f32.xlu0 %v1068
        %v1070 = vpop.xlane.xlu0 %1069
        %v1071 = vsub.f32 %v1063, %v1070
        %v1072 = vmul.f32 %v1071, 1.442695
        %v1073 = vpow.pop %v1072
        %v1074 = vsel %vm730, %v1073, 0.0
        %1075 = vadd.xlane.f32.xlu0 %v1074
        %v1076 = vpop.xlane.xlu0 %1075
        %v1077 = vrcp.pop %v1076
        %v1078 = vmul.f32 %v1073, %v1077
        %v1079 = vpack.c.bf16 %v1078, %v1078
        %v1081 = vsel %vm730, %v1079, 0
        %v1083 = vsel %vm746, %v1021, 0
        %1085 = vmatprep.subr.bf16.mxu0 0
        %1086 = vmatpush1.bf16.msra.mxu0 0
        %1087 = vmatprep.subr.bf16.mxu0 0
        %1088 = vmatpush1.bf16.msra.mxu0 0
        %1089 = vmatprep.subr.bf16.mxu0 0
        %1090 = vmatpush1.bf16.msra.mxu0 0
        %1091 = vmatprep.subr.bf16.mxu0 0
        %1092 = vmatpush1.bf16.msra.mxu0 0
        %1093 = vmatprep.subr.bf16.mxu0 0
        %1094 = vmatpush1.bf16.msra.mxu0 0
        %1095 = vmatprep.subr.bf16.mxu0 0
        %1096 = vmatpush1.bf16.msra.mxu0 0
        %1097 = vmatprep.subr.bf16.mxu0 0
        %1098 = vmatpush1.bf16.msra.mxu0 0
        %1099 = vmatprep.subr.bf16.mxu0 0
        %1100 = vmatpush1.bf16.msra.mxu0 %v1083
        %1101 = vmatprep.subr.bf16.mxu0 0
        %1102 = vmatpush2.bf16.msra.mxu0 0
        %1103 = vmatprep.subr.bf16.mxu0 0
        %1104 = vmatpush2.bf16.msra.mxu0 0
        %1105 = vmatprep.subr.bf16.mxu0 0
        %1106 = vmatpush2.bf16.msra.mxu0 0
        %1107 = vmatprep.subr.bf16.mxu0 0
        %1108 = vmatpush2.bf16.msra.mxu0 0
        %1109 = vmatprep.subr.bf16.mxu0 0
        %1110 = vmatpush2.bf16.msra.mxu0 0
        %1111 = vmatprep.subr.bf16.mxu0 0
        %1112 = vmatpush2.bf16.msra.mxu0 0
        %1113 = vmatprep.subr.bf16.mxu0 0
        %1114 = vmatpush2.bf16.msra.mxu0 0
        %1115 = vmatprep.subr.bf16.mxu0 0
        %1116 = vmatpush2.bf16.msra.mxu0 0
        %1117 = vmatprep.mubr.bf16.mxu0 0
        %1118 = vmatmul.mubr.bf16.gmra.mxu0 %v1081
        %v1119 = vpop.f32.mrf.mxu0
        %v1120 = vadd.f32 0.0, %v1119
        %v1121 = vpop.f32.mrf.mxu0
        %v1122 = vpop.f32.mrf.mxu0
        %v1123 = vpop.f32.mrf.mxu0
        %1124 = vdwg.mxu0
        %1126 = vrot.lane.b32.xlu0 %v1120, 96
        %v1127 = vpop.permute.xlu0 %1126
        %vm1129 = vcmask 1048320
        %1130 = vst.msk [vmem:[#allocation2] sm:$0xff] %vm1129, %v1127
        %v1131 = vld [vmem:[#allocation2] sm:$0xff]
        %v1132 = vpack.c.bf16 %v1131, %v1131
        %v1149 = vunpack.c.l.b16 %v619
        %v1150 = vunpack.c.l.b16 %v620
        %v1151 = vunpack.c.l.b16 %v621
        %v1152 = vunpack.c.l.b16 %v622
        %v1153 = vunpack.c.l.b16 %v623
        %v1154 = vunpack.c.l.b16 %v624
        %v1155 = vunpack.c.l.b16 %v625
        %v1156 = vunpack.c.l.b16 %v626
        %v1157 = vunpack.c.l.b16 %v627
        %v1158 = vunpack.c.l.b16 %v628
        %v1159 = vunpack.c.l.b16 %v629
        %v1160 = vunpack.c.l.b16 %v630
        %v1161 = vunpack.c.l.b16 %v631
        %v1162 = vunpack.c.l.b16 %v632
        %v1163 = vunpack.c.l.b16 %v633
        %v1164 = vunpack.c.l.b16 %v634
        %v1165 = vpack.c.b16 %v1150, %v1149
        %v1166 = vpack.c.b16 %v1152, %v1151
        %v1167 = vpack.c.b16 %v1154, %v1153
        %v1168 = vpack.c.b16 %v1156, %v1155
        %v1169 = vpack.c.b16 %v1158, %v1157
        %v1170 = vpack.c.b16 %v1160, %v1159
        %v1171 = vpack.c.b16 %v1162, %v1161
        %v1172 = vpack.c.b16 %v1164, %v1163
        %1181 = vmatprep.subr.bf16.mxu0 0
        %1182 = vmatpush1.bf16.msra.mxu0 %v1172
        %1183 = vmatprep.subr.bf16.mxu0 0
        %1184 = vmatpush1.bf16.msra.mxu0 %v1171
        %1185 = vmatprep.subr.bf16.mxu0 0
        %1186 = vmatpush1.bf16.msra.mxu0 %v1170
        %1187 = vmatprep.subr.bf16.mxu0 0
        %1188 = vmatpush1.bf16.msra.mxu0 %v1169
        %1189 = vmatprep.subr.bf16.mxu0 0
        %1190 = vmatpush1.bf16.msra.mxu0 %v1168
        %1191 = vmatprep.subr.bf16.mxu0 0
        %1192 = vmatpush1.bf16.msra.mxu0 %v1167
        %1193 = vmatprep.subr.bf16.mxu0 0
        %1194 = vmatpush1.bf16.msra.mxu0 %v1166
        %1195 = vmatprep.subr.bf16.mxu0 0
        %1196 = vmatpush1.bf16.msra.mxu0 %v1165
        %1197 = vmatprep.subr.bf16.mxu0 0
        %1198 = vmatpush2.bf16.msra.mxu0 0
        %1199 = vmatprep.subr.bf16.mxu0 0
        %1200 = vmatpush2.bf16.msra.mxu0 0
        %1201 = vmatprep.subr.bf16.mxu0 0
        %1202 = vmatpush2.bf16.msra.mxu0 0
        %1203 = vmatprep.subr.bf16.mxu0 0
        %1204 = vmatpush2.bf16.msra.mxu0 0
        %1205 = vmatprep.subr.bf16.mxu0 0
        %1206 = vmatpush2.bf16.msra.mxu0 0
        %1207 = vmatprep.subr.bf16.mxu0 0
        %1208 = vmatpush2.bf16.msra.mxu0 0
        %1209 = vmatprep.subr.bf16.mxu0 0
        %1210 = vmatpush2.bf16.msra.mxu0 0
        %1211 = vmatprep.subr.bf16.mxu0 0
        %1212 = vmatpush2.bf16.msra.mxu0 0
        %1213 = vmatprep.mubr.bf16.mxu0 0
        %1214 = vmatmul.mubr.bf16.gmra.mxu0 %v1132
        %v1215 = vpop.f32.mrf.mxu0
        %v1216 = vadd.f32 %v615, %v1215
        %v1217 = vpop.f32.mrf.mxu0
        %v1218 = vpop.f32.mrf.mxu0
        %v1219 = vpop.f32.mrf.mxu0
        %1220 = vdwg.mxu0
        %v1221 = vld [vmem:[%s594] sm:$0x1]
        %v1222 = vld [vmem:[%s502] sm:$0x1]
        %1223 = vadd.xlane.f32.xlu0 %v1216
        %v1224 = vpop.xlane.xlu0 %1223
        %v1225 = vrcp.pop 128.0
        %v1226 = vmul.f32 %v1224, %v1225
        %v1227 = vsub.f32 %v1216, %v1226
        %v1228 = vmul.f32 %v1227, %v1227
        %1229 = vadd.xlane.f32.xlu0 %v1228
        %v1230 = vpop.xlane.xlu0 %1229
        %v1231 = vmul.f32 %v1230, %v1225
        %v1232 = vadd.f32 %v1231, 1e-05
        %v1233 = vrsqrt.pop %v1232
        %v1234 = vmul.f32 %v1227, %v1233
        %v1236 = vlaneseq
        %v1237 = vshrl.u32 %v1236, 7
        %v1238 = vsub.s32 0, %v1237
        %v1239 = vrot.slane %v1221, %v1238
        %v1241 = vmul.f32 %v1234, %v1239
        %v1243 = vlaneseq
        %v1244 = vshrl.u32 %v1243, 7
        %v1245 = vsub.s32 0, %v1244
        %v1246 = vrot.slane %v1222, %v1245
        %v1248 = vadd.f32 %v1241, %v1246
        %v1249 = vpack.c.bf16 %v1248, %v1248
        %v1250 = vld [vmem:[%s598] sm:$0x3]
        %v1252 = vlaneseq
        %v1253 = vshrl.u32 %v1252, 7
        %v1254 = vsub.s32 0, %v1253
        %v1255 = vrot.slane %v1250, %v1254
        %v1256 = vlaneseq
        %v1257 = vshrl.u32 %v1256, 7
        %v1258 = vsub.s32 1, %v1257
        %v1259 = vrot.slane %v1250, %v1258
        %v1278 = vunpack.c.l.b16 %v635
        %v1279 = vunpack.c.h.b16 %v635
        %v1280 = vunpack.c.l.b16 %v636
        %v1281 = vunpack.c.h.b16 %v636
        %v1282 = vunpack.c.l.b16 %v637
        %v1283 = vunpack.c.h.b16 %v637
        %v1284 = vunpack.c.l.b16 %v638
        %v1285 = vunpack.c.h.b16 %v638
        %v1286 = vunpack.c.l.b16 %v639
        %v1287 = vunpack.c.h.b16 %v639
        %v1288 = vunpack.c.l.b16 %v640
        %v1289 = vunpack.c.h.b16 %v640
        %v1290 = vunpack.c.l.b16 %v641
        %v1291 = vunpack.c.h.b16 %v641
        %v1292 = vunpack.c.l.b16 %v642
        %v1293 = vunpack.c.h.b16 %v642
        %v1294 = vunpack.c.l.b16 %v643
        %v1295 = vunpack.c.h.b16 %v643
        %v1296 = vunpack.c.l.b16 %v644
        %v1297 = vunpack.c.h.b16 %v644
        %v1298 = vunpack.c.l.b16 %v645
        %v1299 = vunpack.c.h.b16 %v645
        %v1300 = vunpack.c.l.b16 %v646
        %v1301 = vunpack.c.h.b16 %v646
        %v1302 = vunpack.c.l.b16 %v647
        %v1303 = vunpack.c.h.b16 %v647
        %v1304 = vunpack.c.l.b16 %v648
        %v1305 = vunpack.c.h.b16 %v648
        %v1306 = vunpack.c.l.b16 %v649
        %v1307 = vunpack.c.h.b16 %v649
        %v1308 = vunpack.c.l.b16 %v650
        %v1309 = vunpack.c.h.b16 %v650
        %v1310 = vpack.c.b16 %v1280, %v1278
        %v1311 = vpack.c.b16 %v1281, %v1279
        %v1312 = vpack.c.b16 %v1284, %v1282
        %v1313 = vpack.c.b16 %v1285, %v1283
        %v1314 = vpack.c.b16 %v1288, %v1286
        %v1315 = vpack.c.b16 %v1289, %v1287
        %v1316 = vpack.c.b16 %v1292, %v1290
        %v1317 = vpack.c.b16 %v1293, %v1291
        %v1318 = vpack.c.b16 %v1296, %v1294
        %v1319 = vpack.c.b16 %v1297, %v1295
        %v1320 = vpack.c.b16 %v1300, %v1298
        %v1321 = vpack.c.b16 %v1301, %v1299
        %v1322 = vpack.c.b16 %v1304, %v1302
        %v1323 = vpack.c.b16 %v1305, %v1303
        %v1324 = vpack.c.b16 %v1308, %v1306
        %v1325 = vpack.c.b16 %v1309, %v1307
        %1342 = vmatprep.subr.bf16.mxu0 %v1325
        %1343 = vmatpush1.bf16.msra.mxu0 %v1324
        %1344 = vmatprep.subr.bf16.mxu0 %v1323
        %1345 = vmatpush1.bf16.msra.mxu0 %v1322
        %1346 = vmatprep.subr.bf16.mxu0 %v1321
        %1347 = vmatpush1.bf16.msra.mxu0 %v1320
        %1348 = vmatprep.subr.bf16.mxu0 %v1319
        %1349 = vmatpush1.bf16.msra.mxu0 %v1318
        %1350 = vmatprep.subr.bf16.mxu0 %v1317
        %1351 = vmatpush1.bf16.msra.mxu0 %v1316
        %1352 = vmatprep.subr.bf16.mxu0 %v1315
        %1353 = vmatpush1.bf16.msra.mxu0 %v1314
        %1354 = vmatprep.subr.bf16.mxu0 %v1313
        %1355 = vmatpush1.bf16.msra.mxu0 %v1312
        %1356 = vmatprep.subr.bf16.mxu0 %v1311
        %1357 = vmatpush1.bf16.msra.mxu0 %v1310
        %1358 = vmatprep.subr.bf16.mxu0 0
        %1359 = vmatpush2.bf16.msra.mxu0 0
        %1360 = vmatprep.subr.bf16.mxu0 0
        %1361 = vmatpush2.bf16.msra.mxu0 0
        %1362 = vmatprep.subr.bf16.mxu0 0
        %1363 = vmatpush2.bf16.msra.mxu0 0
        %1364 = vmatprep.subr.bf16.mxu0 0
        %1365 = vmatpush2.bf16.msra.mxu0 0
        %1366 = vmatprep.subr.bf16.mxu0 0
        %1367 = vmatpush2.bf16.msra.mxu0 0
        %1368 = vmatprep.subr.bf16.mxu0 0
        %1369 = vmatpush2.bf16.msra.mxu0 0
        %1370 = vmatprep.subr.bf16.mxu0 0
        %1371 = vmatpush2.bf16.msra.mxu0 0
        %1372 = vmatprep.subr.bf16.mxu0 0
        %1373 = vmatpush2.bf16.msra.mxu0 0
        %1374 = vmatprep.mubr.bf16.mxu0 0
        %1375 = vmatmul.mubr.bf16.gmra.mxu0 %v1249
        %v1376 = vpop.f32.mrf.mxu0
        %v1377 = vadd.f32 %v1255, %v1376
        %v1378 = vpop.f32.mrf.mxu0
        %v1379 = vadd.f32 %v1259, %v1378
        %v1380 = vpop.f32.mrf.mxu0
        %v1381 = vpop.f32.mrf.mxu0
        %1382 = vdwg.mxu0
        %v1383 = vmax.f32 %v1377, 0.0
        %v1384 = vmax.f32 %v1379, 0.0
        %v1385 = vpack.c.bf16 %v1383, %v1383
        %v1386 = vpack.c.bf16 %v1384, %v1384
        %v1387 = vld [vmem:[%s601] sm:$0x1]
        %v1389 = vlaneseq
        %v1390 = vshrl.u32 %v1389, 7
        %v1391 = vsub.s32 0, %v1390
        %v1392 = vrot.slane %v1387, %v1391
        %v1426 = vunpack.c.l.b16 %v651
        %v1427 = vunpack.c.l.b16 %v652
        %v1428 = vunpack.c.l.b16 %v653
        %v1429 = vunpack.c.l.b16 %v654
        %v1430 = vunpack.c.l.b16 %v655
        %v1431 = vunpack.c.l.b16 %v656
        %v1432 = vunpack.c.l.b16 %v657
        %v1433 = vunpack.c.l.b16 %v658
        %v1434 = vunpack.c.l.b16 %v659
        %v1435 = vunpack.c.l.b16 %v660
        %v1436 = vunpack.c.l.b16 %v661
        %v1437 = vunpack.c.l.b16 %v662
        %v1438 = vunpack.c.l.b16 %v663
        %v1439 = vunpack.c.l.b16 %v664
        %v1440 = vunpack.c.l.b16 %v665
        %v1441 = vunpack.c.l.b16 %v666
        %v1442 = vunpack.c.l.b16 %v667
        %v1443 = vunpack.c.l.b16 %v668
        %v1444 = vunpack.c.l.b16 %v669
        %v1445 = vunpack.c.l.b16 %v670
        %v1446 = vunpack.c.l.b16 %v671
        %v1447 = vunpack.c.l.b16 %v672
        %v1448 = vunpack.c.l.b16 %v673
        %v1449 = vunpack.c.l.b16 %v674
        %v1450 = vunpack.c.l.b16 %v675
        %v1451 = vunpack.c.l.b16 %v676
        %v1452 = vunpack.c.l.b16 %v677
        %v1453 = vunpack.c.l.b16 %v678
        %v1454 = vunpack.c.l.b16 %v679
        %v1455 = vunpack.c.l.b16 %v680
        %v1456 = vunpack.c.l.b16 %v681
        %v1457 = vunpack.c.l.b16 %v682
        %v1458 = vpack.c.b16 %v1427, %v1426
        %v1459 = vpack.c.b16 %v1429, %v1428
        %v1460 = vpack.c.b16 %v1431, %v1430
        %v1461 = vpack.c.b16 %v1433, %v1432
        %v1462 = vpack.c.b16 %v1435, %v1434
        %v1463 = vpack.c.b16 %v1437, %v1436
        %v1464 = vpack.c.b16 %v1439, %v1438
        %v1465 = vpack.c.b16 %v1441, %v1440
        %v1466 = vpack.c.b16 %v1443, %v1442
        %v1467 = vpack.c.b16 %v1445, %v1444
        %v1468 = vpack.c.b16 %v1447, %v1446
        %v1469 = vpack.c.b16 %v1449, %v1448
        %v1470 = vpack.c.b16 %v1451, %v1450
        %v1471 = vpack.c.b16 %v1453, %v1452
        %v1472 = vpack.c.b16 %v1455, %v1454
        %v1473 = vpack.c.b16 %v1457, %v1456
        %1490 = vmatprep.subr.bf16.mxu0 0
        %1491 = vmatpush1.bf16.msra.mxu0 %v1465
        %1492 = vmatprep.subr.bf16.mxu0 0
        %1493 = vmatpush1.bf16.msra.mxu0 %v1464
        %1494 = vmatprep.subr.bf16.mxu0 0
        %1495 = vmatpush1.bf16.msra.mxu0 %v1463
        %1496 = vmatprep.subr.bf16.mxu0 0
        %1497 = vmatpush1.bf16.msra.mxu0 %v1462
        %1498 = vmatprep.subr.bf16.mxu0 0
        %1499 = vmatpush1.bf16.msra.mxu0 %v1461
        %1500 = vmatprep.subr.bf16.mxu0 0
        %1501 = vmatpush1.bf16.msra.mxu0 %v1460
        %1502 = vmatprep.subr.bf16.mxu0 0
        %1503 = vmatpush1.bf16.msra.mxu0 %v1459
        %1504 = vmatprep.subr.bf16.mxu0 0
        %1505 = vmatpush1.bf16.msra.mxu0 %v1458
        %1506 = vmatprep.subr.bf16.mxu0 0
        %1507 = vmatpush2.bf16.msra.mxu0 %v1473
        %1508 = vmatprep.subr.bf16.mxu0 0
        %1509 = vmatpush2.bf16.msra.mxu0 %v1472
        %1510 = vmatprep.subr.bf16.mxu0 0
        %1511 = vmatpush2.bf16.msra.mxu0 %v1471
        %1512 = vmatprep.subr.bf16.mxu0 0
        %1513 = vmatpush2.bf16.msra.mxu0 %v1470
        %1514 = vmatprep.subr.bf16.mxu0 0
        %1515 = vmatpush2.bf16.msra.mxu0 %v1469
        %1516 = vmatprep.subr.bf16.mxu0 0
        %1517 = vmatpush2.bf16.msra.mxu0 %v1468
        %1518 = vmatprep.subr.bf16.mxu0 0
        %1519 = vmatpush2.bf16.msra.mxu0 %v1467
        %1520 = vmatprep.subr.bf16.mxu0 0
        %1521 = vmatpush2.bf16.msra.mxu0 %v1466
        %1522 = vmatprep.mubr.bf16.mxu0 %v1386
        %1523 = vmatmul.mubr.bf16.gmra.mxu0 %v1385
        %v1524 = vpop.f32.mrf.mxu0
        %v1525 = vadd.f32 %v1392, %v1524
        %v1526 = vpop.f32.mrf.mxu0
        %v1527 = vpop.f32.mrf.mxu0
        %v1528 = vpop.f32.mrf.mxu0
        %1529 = vdwg.mxu0
        %v1530 = vadd.f32 %v1525, %v1248
        %v1531 = vld [vmem:[%s604] sm:$0x1]
        %v1532 = vld [vmem:[%s607] sm:$0x1]
        %1533 = vadd.xlane.f32.xlu0 %v1530
        %v1534 = vpop.xlane.xlu0 %1533
        %v1535 = vmul.f32 %v1534, %v1225
        %v1536 = vsub.f32 %v1530, %v1535
        %v1537 = vmul.f32 %v1536, %v1536
        %1538 = vadd.xlane.f32.xlu0 %v1537
        %v1539 = vpop.xlane.xlu0 %1538
        %v1540 = vmul.f32 %v1539, %v1225
        %v1541 = vadd.f32 %v1540, 1e-05
        %v1542 = vrsqrt.pop %v1541
        %v1543 = vmul.f32 %v1536, %v1542
        %v1545 = vlaneseq
        %v1546 = vshrl.u32 %v1545, 7
        %v1547 = vsub.s32 0, %v1546
        %v1548 = vrot.slane %v1531, %v1547
        %v1550 = vmul.f32 %v1543, %v1548
        %v1552 = vlaneseq
        %v1553 = vshrl.u32 %v1552, 7
        %v1554 = vsub.s32 0, %v1553
        %v1555 = vrot.slane %v1532, %v1554
        %v1557 = vadd.f32 %v1550, %v1555
        %1558 = vst [vmem:[%s591] sm:$0xff] %v1557
        %s1559 = sand.u32 %s313, 1
        %s1560 = scalar_lea.sflag [#allocation5], %s1559
        %s1561 = sand.u32 %s313, 1
        %s1562 = smul.addr %s1561, 8
        %s1563 = scalar_lea.vmem [#allocation12], %s1562
        // Predicated region
        $region85: #{tpu_custom_call.1} parent=59 // pred_check
          %p1564 = pneg %p323
        $region86: #{tpu_custom_call.1} parent=59 // pred_check_branch
          %1566 = sbr.rel (%p1564) target = $region88
        $region87: #{tpu_custom_call.1} parent=59 // pred_region
          %s1568 = ssub.s32 128, 128
          %1569 = vsyncadd %s1560, %s1568
          %s1570 = smul.addr %s37, 128
          %s1571 = scalar_lea.hbm %s10, %s1570
          %s1573 = sshll.u32 %s1563, 4
          %s1574 = int_to_ptr.vmem [resolvable:$true] %s1573
          %1576 = dma.vmem_to_hbm [thread:$0]  %s1574, 128, %s1571, %s1560
        $region88: #{tpu_custom_call.1} parent=59 // pred_fallthru
          _
      $region60: #{tpu_custom_call.1} parent=5 // pred_fallthru
        _
      %p1577 = scmp.le.s32.totalorder 2, %s28
      // Predicated region
      $region89: #{tpu_custom_call.1} parent=5 // pred_check
        %p1578 = pneg %p1577
      $region90: #{tpu_custom_call.1} parent=5 // pred_check_branch
        %1580 = sbr.rel (%p1578) target = $region92
      $region91: #{tpu_custom_call.1} parent=5 // pred_region
        %s1581 = ssub.s32 %s28, 2
        // Predicated region
        $region93: #{tpu_custom_call.1} parent=91 // pred_check
          %p1582 = pneg %p329
        $region94: #{tpu_custom_call.1} parent=91 // pred_check_branch
          %1584 = sbr.rel (%p1582) target = $region96
        $region95: #{tpu_custom_call.1} parent=91 // pred_region
          %s1585 = sand.u32 %s314, 1
          %s1586 = scalar_lea.sflag [#allocation5], %s1585
          %s1587 = sand.u32 %s314, 1
          %s1588 = smul.addr %s1587, 8
          %s1589 = scalar_lea.vmem [#allocation12], %s1588
          %1590 = dma.done %s1586, 128
        $region96: #{tpu_custom_call.1} parent=91 // pred_fallthru
          _
      $region92: #{tpu_custom_call.1} parent=5 // pred_fallthru
        _
    $region6: #{tpu_custom_call.1} parent=1 // loop_footer
      %s32 = sadd.s32 1, %s28
    $region7: #{tpu_custom_call.1} parent=1 // loop_footer_branch
      %27 = sbr.rel target = $region3
    $region8: #{tpu_custom_call.1} parent=1 // loop_exit
      _
    %1591 = vsyncpa [#allocation4], 1
    %s1592 = scalar_lea.sflag [#allocation4], 1
    %1593 = vsyncpa %s1592, 1
    %1594 = vsyncpa [#allocation7], 1
    %s1595 = scalar_lea.sflag [#allocation7], 1
    %1596 = vsyncpa %s1595, 1
    %1597 = vsyncpa [#allocation10], 1
    %s1598 = scalar_lea.sflag [#allocation10], 1
    %1599 = vsyncpa %s1598, 1
    %1600 = vsyncpa [#allocation5], 1
    %s1601 = scalar_lea.sflag [#allocation5], 1
    %1602 = vsyncpa %s1601, 1

</llo_original>
